<compile_context>
chip_gen: v5e
topology: v5e:2x2
jax: 0.10.0
libtpu: 0.0.40
codegen_flags: <defaults>
</compile_context>

<pallas_src>
import functools
import numpy as np
import jax
import jax.numpy as jnp
from jax.experimental import pallas as pl
from jax.experimental.pallas import tpu as pltpu

F32_EPS = 1.1920929e-07   # torch.finfo(torch.float32).eps
BF16_EPS = 0.0078125      # torch.finfo(torch.bfloat16).eps (nn.RMSNorm(eps=None) on bf16 input)


# ----------------------------- spectral filter setup (glue, numpy) -----------------------------

def get_hankel(seq_len: int, use_hankel_L: bool = False) -> np.ndarray:
    entries = np.arange(1, seq_len + 1, dtype=np.float32)
    i_plus_j = entries[:, None] + entries[None, :]
    if use_hankel_L:
        sgn = (-1.0) ** (i_plus_j - 2.0) + 1.0
        denom = (i_plus_j + 3.0) * (i_plus_j - 1.0) * (i_plus_j + 1.0)
        Z = sgn * (8.0 / denom)
    else:
        Z = 2.0 / (i_plus_j ** 3 - i_plus_j)
    return Z.astype(np.float32)


def get_spectral_filters(seq_len: int, K: int, use_hankel_L: bool = False) -> np.ndarray:
    Z = get_hankel(seq_len, use_hankel_L)
    sigma, phi = np.linalg.eigh(Z)
    sigma_k, phi_k = sigma[-K:], phi[:, -K:]
    sigma_k = np.clip(sigma_k, 1e-9, None)
    phi_k = phi_k * sigma_k ** 0.25
    return phi_k.astype(np.float32)


# ----------------------------------------- kernel ---------------------------------------------

def _rms_norm(x, w, eps):
    # x: (R, D) f32, w: (1, D) f32
    ms = jnp.mean(x * x, axis=-1, keepdims=True)
    return x * jax.lax.rsqrt(ms + eps) * w


def _spectral_layer_kernel(
    x_ref,        # (R, D)   f32   R = batch_tile * T  (flattened batch*seq rows)
    wqkv_ref,     # (D, 3K)  bf16  [wq | K_filters | V_filters]
    bqkv_ref,     # (1, 3K)  f32   [bq | 0 | 0]
    L_ref,        # (T, T)   bf16  tril(hankel)
    wo_ref,       # (K, D)   bf16  o_proj weight
    w13_ref,      # (D, 8D)  f32   [w1 | w3]
    b13_ref,      # (1, 8D)  f32   [b1 | b3]
    w2_ref,       # (4D, D)  f32
    vecs_ref,     # (4, D)   f32   rows: [bo; attn_norm_w; b2; out_norm_w]
    out_ref,      # (R, D)   f32
    *, batch_tile, T, K, inter,
):
    x = x_ref[...]                              # (R, D) f32
    xb = x.astype(jnp.bfloat16)                 # pre_proj is Identity (d_model == seq_len)

    # ---- fused Q / K / V projection: one MXU push, f32 accumulation, bf16 rounding ----
    qkv = (jnp.dot(xb, wqkv_ref[...], preferred_element_type=jnp.float32)
           + bqkv_ref[...]).astype(jnp.bfloat16)            # (R, 3K)
    q  = qkv[:, 0 * K:1 * K]
    k_ = qkv[:, 1 * K:2 * K]
    v_ = qkv[:, 2 * K:3 * K]

    L = L_ref[...]                                           # (T, T) bf16

    # ---- causal-Hankel stage, per batch inside the row tile ----
    # Algebraic fusion of the Z / H / Y einsums:
    #   Y[t,n] = sum_s L[t,s] * (sum_p Q[t,p] * V_[s,p]) * K_[s,n] = ((Q @ V_^T) * L) @ K_
    nt_dims = (((1,), (1,)), ((), ()))                       # contract last dims (no transpose op)
    ys = []
    for b in range(batch_tile):                              # tiny static loop (batch_tile ~ 2-4)
        r0 = b * T
        qb = q[r0:r0 + T, :]
        kb = k_[r0:r0 + T, :]
        vb = v_[r0:r0 + T, :]
        scores = jax.lax.dot_general(qb, vb, nt_dims,
                                     preferred_element_type=jnp.float32)   # (T, T) f32
        p = scores.astype(jnp.bfloat16) * L                                 # bf16 mask multiply
        ys.append(jnp.dot(p, kb, preferred_element_type=jnp.float32))       # (T, K) f32
    y = ys[0] if batch_tile == 1 else jnp.concatenate(ys, axis=0)           # (R, K)

    bo      = vecs_ref[0:1, :]
    attn_nw = vecs_ref[1:2, :]
    b2      = vecs_ref[2:3, :]
    out_nw  = vecs_ref[3:4, :]

    # ---- o_proj (bf16 operands, f32 acc) + attention-branch RMSNorm ----
    yo = (jnp.dot(y.astype(jnp.bfloat16), wo_ref[...],
                  preferred_element_type=jnp.float32) + bo).astype(jnp.bfloat16)
    # torch nn.RMSNorm(eps=None) on a bf16 input uses bf16 eps and upcasts compute to f32.
    attn = _rms_norm(yo.astype(jnp.float32), attn_nw, BF16_EPS)

    # residual 1
    x1 = x + attn

    # ---- MLP: w2(silu(w1(x)) * w3(x)), w1||w3 fused into one lane-dense (D, 8D) matmul ----
    # TODO(synk): casting x1/gated to bf16 here would ~3x MXU throughput on v5e/v6e but
    # diverges from the torch f32 nn.Linear path; kept f32 pending owner sign-off.
    h = jnp.dot(x1, w13_ref[...], preferred_element_type=jnp.float32) + b13_ref[...]
    h1 = h[:, :inter]
    h3 = h[:, inter:]
    gated = (h1 * jax.nn.sigmoid(h1)) * h3
    mlp = jnp.dot(gated, w2_ref[...], preferred_element_type=jnp.float32) + b2

    # residual 2 + final RMSNorm (f32 input -> f32 eps)
    x2 = x1 + mlp
    out_ref[...] = _rms_norm(x2, out_nw, F32_EPS)


# ---------------------------------------- wrapper ---------------------------------------------

def _pick_batch_tile(B, T, target_rows=256):
    """Largest divisor of B whose row count (bt*T) does not exceed ~target_rows."""
    bt = max(1, min(B, max(1, target_rows // T)))
    while B % bt:
        bt -= 1
    return bt


def spectral_attention_layer(x, params, *, target_rows=256):
    """x: (B, T, D) f32; params: (wqkv, bqkv, L, wo, w13, b13, w2, vecs)."""
    B, T, D = x.shape
    wqkv, bqkv, L, wo, w13, b13, w2, vecs = params
    K = wqkv.shape[1] // 3
    inter = w13.shape[1] // 2

    bt = _pick_batch_tile(B, T, target_rows)
    R = bt * T
    grid = (B // bt,)

    x2d = x.reshape(B * T, D)

    rows_map = lambda i: (i, 0)
    const_map = lambda i: (0, 0)        # all weights are 2-D, block index never changes

    kernel = functools.partial(_spectral_layer_kernel,
                               batch_tile=bt, T=T, K=K, inter=inter)

    in_specs = [pl.BlockSpec((R, D), rows_map)]
    in_specs += [pl.BlockSpec(p.shape, const_map) for p in params]

    out2d = pl.pallas_call(
        kernel,
        out_shape=jax.ShapeDtypeStruct((B * T, D), jnp.float32),
        grid=grid,
        in_specs=in_specs,
        out_specs=pl.BlockSpec((R, D), rows_map),
        compiler_params=pltpu.CompilerParams(dimension_semantics=("parallel",)),
    )(x2d, *params)

    return out2d.reshape(B, T, D)


# ------------------------------------ deterministic init --------------------------------------

def init_params(key, seq_len, d_model, k_dim):
    assert seq_len == d_model, "pre_proj is nn.Identity only when d_model == seq_len"
    inter = 4 * d_model
    keys = jax.random.split(key, 10)

    def lin(kw, kb, fan_in, fan_out):
        # torch nn.Linear default init: U(-1/sqrt(fan_in), 1/sqrt(fan_in)); stored as (in, out)
        bound = 1.0 / np.sqrt(fan_in)
        w = jax.random.uniform(kw, (fan_in, fan_out), jnp.float32, -bound, bound)
        b = jax.random.uniform(kb, (1, fan_out), jnp.float32, -bound, bound)
        return w, b

    # --- spectral attention branch (torch stores these params in bf16) ---
    wq, bq = lin(keys[0], keys[1], seq_len, k_dim)
    kf = jnp.asarray(get_spectral_filters(seq_len, k_dim), jnp.float32)
    vf = jnp.asarray(get_spectral_filters(seq_len, k_dim), jnp.float32)
    wqkv = jnp.concatenate([wq, kf, vf], axis=1).astype(jnp.bfloat16)            # (T, 3k)
    # bf16-rounded q bias, kept f32 in-kernel; zero bias for the K/V filter projections
    bqkv = jnp.concatenate([bq.astype(jnp.bfloat16).astype(jnp.float32),
                            jnp.zeros((1, 2 * k_dim), jnp.float32)], axis=1)     # (1, 3k)
    L = jnp.asarray(np.tril(get_hankel(seq_len)), jnp.bfloat16)                  # (T, T)

    wo, bo = lin(keys[2], keys[3], k_dim, d_model)
    wo = wo.astype(jnp.bfloat16)
    bo = bo.astype(jnp.bfloat16).astype(jnp.float32)
    attn_norm_w = jnp.ones((1, d_model), jnp.float32)

    # --- MLP (f32), w1 || w3 fused ---
    w1, b1 = lin(keys[4], keys[5], d_model, inter)
    w3, b3 = lin(keys[6], keys[7], d_model, inter)
    w13 = jnp.concatenate([w1, w3], axis=1)                                      # (D, 8D)
    b13 = jnp.concatenate([b1, b3], axis=1)                                      # (1, 8D)
    w2, b2 = lin(keys[8], keys[9], inter, d_model)

    out_norm_w = jnp.ones((1, d_model), jnp.float32)

    # pack the four (1, D) f32 vectors into one ref: [bo; attn_norm_w; b2; out_norm_w]
    vecs = jnp.concatenate([bo, attn_norm_w, b2, out_norm_w], axis=0)            # (4, D)

    return (wqkv, bqkv, L, wo, w13, b13, w2, vecs)


if __name__ == "__main__":
    # Source script config: seq_len = 64, d_model = 64, k = 16; small batch B = 2.
    B, T, D, K = 2, 64, 64, 16
    key = jax.random.PRNGKey(0)
    kx, kp = jax.random.split(key)

    x = jax.random.normal(kx, (B, T, D), dtype=jnp.float32)
    params = init_params(kp, T, D, K)

    out = spectral_attention_layer(x, params)
    jax.block_until_ready(out)
    assert out.shape == (B, T, D) and out.dtype == jnp.float32
    assert bool(jnp.all(jnp.isfinite(out)))
    print("KERNEL_OK")
</pallas_src>

<mosaic_0001>
module attributes {stable_mosaic.version = 11 : i64} {
  func.func @_spectral_layer_kernel(%arg0: i32, %arg1: memref<128x64xf32, #tpu.memory_space<vmem>>, %arg2: memref<64x48xbf16, #tpu.memory_space<vmem>>, %arg3: memref<1x48xf32, #tpu.memory_space<vmem>>, %arg4: memref<64x64xbf16, #tpu.memory_space<vmem>>, %arg5: memref<16x64xbf16, #tpu.memory_space<vmem>>, %arg6: memref<64x512xf32, #tpu.memory_space<vmem>>, %arg7: memref<1x512xf32, #tpu.memory_space<vmem>>, %arg8: memref<256x64xf32, #tpu.memory_space<vmem>>, %arg9: memref<4x64xf32, #tpu.memory_space<vmem>>, %arg10: memref<128x64xf32, #tpu.memory_space<vmem>>) attributes {dimension_semantics = [#tpu.dimension_semantics<parallel>], iteration_bounds = array<i64: 1>, scalar_prefetch = 0 : i64, scratch_operands = 0 : i64, tpu.core_type = #tpu.core_type<tc>, window_params = [{transform_indices = @transform_0, window_bounds = array<i64: 128, 64>}, {pipeline_mode = #tpu.pipeline_mode<synchronous>, transform_indices = @transform_1, window_bounds = array<i64: 64, 48>}, {pipeline_mode = #tpu.pipeline_mode<synchronous>, transform_indices = @transform_2, window_bounds = array<i64: 1, 48>}, {pipeline_mode = #tpu.pipeline_mode<synchronous>, transform_indices = @transform_3, window_bounds = array<i64: 64, 64>}, {pipeline_mode = #tpu.pipeline_mode<synchronous>, transform_indices = @transform_4, window_bounds = array<i64: 16, 64>}, {pipeline_mode = #tpu.pipeline_mode<synchronous>, transform_indices = @transform_5, window_bounds = array<i64: 64, 512>}, {pipeline_mode = #tpu.pipeline_mode<synchronous>, transform_indices = @transform_6, window_bounds = array<i64: 1, 512>}, {pipeline_mode = #tpu.pipeline_mode<synchronous>, transform_indices = @transform_7, window_bounds = array<i64: 256, 64>}, {pipeline_mode = #tpu.pipeline_mode<synchronous>, transform_indices = @transform_8, window_bounds = array<i64: 4, 64>}, {transform_indices = @transform_9, window_bounds = array<i64: 128, 64>}]} {
    %c0 = arith.constant 0 : index
    %c0_0 = arith.constant 0 : index
    %0 = vector.load %arg1[%c0, %c0_0] : memref<128x64xf32, #tpu.memory_space<vmem>>, vector<128x64xf32>
    %1 = arith.truncf %0 : vector<128x64xf32> to vector<128x64xbf16>
    %c0_1 = arith.constant 0 : index
    %c0_2 = arith.constant 0 : index
    %2 = vector.load %arg2[%c0_1, %c0_2] : memref<64x48xbf16, #tpu.memory_space<vmem>>, vector<64x48xbf16>
    %cst = arith.constant dense<0.000000e+00> : vector<128x48xf32>
    %3 = tpu.matmul %1, %2, %cst {dimension_numbers = #tpu.dot_dimension_numbers<[1], [0], [0], [1], [0, 0, 1, 1], [], []>} : vector<128x64xbf16>, vector<64x48xbf16>, vector<128x48xf32> -> vector<128x48xf32>
    %c0_3 = arith.constant 0 : index
    %c0_4 = arith.constant 0 : index
    %4 = vector.load %arg3[%c0_3, %c0_4] : memref<1x48xf32, #tpu.memory_space<vmem>>, vector<1x48xf32>
    %5 = vector.broadcast %4 : vector<1x48xf32> to vector<128x48xf32>
    %6 = arith.addf %3, %5 : vector<128x48xf32>
    %7 = arith.truncf %6 : vector<128x48xf32> to vector<128x48xbf16>
    %8 = vector.extract_strided_slice %7 {offsets = [0, 0], sizes = [128, 16], strides = [1, 1]} : vector<128x48xbf16> to vector<128x16xbf16>
    %9 = vector.extract_strided_slice %7 {offsets = [0, 16], sizes = [128, 16], strides = [1, 1]} : vector<128x48xbf16> to vector<128x16xbf16>
    %10 = vector.extract_strided_slice %7 {offsets = [0, 32], sizes = [128, 16], strides = [1, 1]} : vector<128x48xbf16> to vector<128x16xbf16>
    %c0_5 = arith.constant 0 : index
    %c0_6 = arith.constant 0 : index
    %11 = vector.load %arg4[%c0_5, %c0_6] : memref<64x64xbf16, #tpu.memory_space<vmem>>, vector<64x64xbf16>
    %12 = vector.extract_strided_slice %8 {offsets = [0, 0], sizes = [64, 16], strides = [1, 1]} : vector<128x16xbf16> to vector<64x16xbf16>
    %13 = vector.extract_strided_slice %9 {offsets = [0, 0], sizes = [64, 16], strides = [1, 1]} : vector<128x16xbf16> to vector<64x16xbf16>
    %14 = vector.extract_strided_slice %10 {offsets = [0, 0], sizes = [64, 16], strides = [1, 1]} : vector<128x16xbf16> to vector<64x16xbf16>
    %cst_7 = arith.constant dense<0.000000e+00> : vector<64x64xf32>
    %15 = tpu.matmul %12, %14, %cst_7 {dimension_numbers = #tpu.dot_dimension_numbers<[1], [1], [0], [0], [0, 0, 1, 0], [], []>} : vector<64x16xbf16>, vector<64x16xbf16>, vector<64x64xf32> -> vector<64x64xf32>
    %16 = arith.truncf %15 : vector<64x64xf32> to vector<64x64xbf16>
    %17 = arith.mulf %16, %11 : vector<64x64xbf16>
    %cst_8 = arith.constant dense<0.000000e+00> : vector<64x16xf32>
    %18 = tpu.matmul %17, %13, %cst_8 {dimension_numbers = #tpu.dot_dimension_numbers<[1], [0], [0], [1], [0, 0, 1, 1], [], []>} : vector<64x64xbf16>, vector<64x16xbf16>, vector<64x16xf32> -> vector<64x16xf32>
    %19 = vector.extract_strided_slice %8 {offsets = [64, 0], sizes = [64, 16], strides = [1, 1]} : vector<128x16xbf16> to vector<64x16xbf16>
    %20 = vector.extract_strided_slice %9 {offsets = [64, 0], sizes = [64, 16], strides = [1, 1]} : vector<128x16xbf16> to vector<64x16xbf16>
    %21 = vector.extract_strided_slice %10 {offsets = [64, 0], sizes = [64, 16], strides = [1, 1]} : vector<128x16xbf16> to vector<64x16xbf16>
    %cst_9 = arith.constant dense<0.000000e+00> : vector<64x64xf32>
    %22 = tpu.matmul %19, %21, %cst_9 {dimension_numbers = #tpu.dot_dimension_numbers<[1], [1], [0], [0], [0, 0, 1, 0], [], []>} : vector<64x16xbf16>, vector<64x16xbf16>, vector<64x64xf32> -> vector<64x64xf32>
    %23 = arith.truncf %22 : vector<64x64xf32> to vector<64x64xbf16>
    %24 = arith.mulf %23, %11 : vector<64x64xbf16>
    %cst_10 = arith.constant dense<0.000000e+00> : vector<64x16xf32>
    %25 = tpu.matmul %24, %20, %cst_10 {dimension_numbers = #tpu.dot_dimension_numbers<[1], [0], [0], [1], [0, 0, 1, 1], [], []>} : vector<64x64xbf16>, vector<64x16xbf16>, vector<64x16xf32> -> vector<64x16xf32>
    %26 = tpu.concatenate %18, %25 in 0 : vector<64x16xf32>, vector<64x16xf32> -> vector<128x16xf32>
    %c0_11 = arith.constant 0 : index
    %c0_12 = arith.constant 0 : index
    %27 = vector.load %arg9[%c0_11, %c0_12] : memref<4x64xf32, #tpu.memory_space<vmem>>, vector<1x64xf32>
    %c1 = arith.constant 1 : index
    %c0_13 = arith.constant 0 : index
    %28 = vector.load %arg9[%c1, %c0_13] : memref<4x64xf32, #tpu.memory_space<vmem>>, vector<1x64xf32>
    %c2 = arith.constant 2 : index
    %c0_14 = arith.constant 0 : index
    %29 = vector.load %arg9[%c2, %c0_14] : memref<4x64xf32, #tpu.memory_space<vmem>>, vector<1x64xf32>
    %c3 = arith.constant 3 : index
    %c0_15 = arith.constant 0 : index
    %30 = vector.load %arg9[%c3, %c0_15] : memref<4x64xf32, #tpu.memory_space<vmem>>, vector<1x64xf32>
    %31 = arith.truncf %26 : vector<128x16xf32> to vector<128x16xbf16>
    %c0_16 = arith.constant 0 : index
    %c0_17 = arith.constant 0 : index
    %32 = vector.load %arg5[%c0_16, %c0_17] : memref<16x64xbf16, #tpu.memory_space<vmem>>, vector<16x64xbf16>
    %cst_18 = arith.constant dense<0.000000e+00> : vector<128x64xf32>
    %33 = tpu.matmul %31, %32, %cst_18 {dimension_numbers = #tpu.dot_dimension_numbers<[1], [0], [0], [1], [0, 0, 1, 1], [], []>} : vector<128x16xbf16>, vector<16x64xbf16>, vector<128x64xf32> -> vector<128x64xf32>
    %34 = vector.broadcast %27 : vector<1x64xf32> to vector<128x64xf32>
    %35 = arith.addf %33, %34 : vector<128x64xf32>
    %36 = arith.truncf %35 : vector<128x64xf32> to vector<128x64xbf16>
    %37 = arith.extf %36 : vector<128x64xbf16> to vector<128x64xf32>
    %38 = arith.mulf %37, %37 : vector<128x64xf32>
    %cst_19 = arith.constant dense<0.000000e+00> : vector<128xf32>
    %39 = vector.multi_reduction <add>, %38, %cst_19 [1] : vector<128x64xf32> to vector<128xf32>
    %40 = vector.shape_cast %39 : vector<128xf32> to vector<128x1xf32>
    %cst_20 = arith.constant 6.400000e+01 : f32
    %41 = vector.broadcast %cst_20 : f32 to vector<128x1xf32>
    %42 = arith.divf %40, %41 : vector<128x1xf32>
    %cst_21 = arith.constant 7.812500e-03 : f32
    %43 = vector.broadcast %cst_21 : f32 to vector<128x1xf32>
    %44 = arith.addf %42, %43 : vector<128x1xf32>
    %45 = math.rsqrt %44 : vector<128x1xf32>
    %46 = vector.broadcast %45 : vector<128x1xf32> to vector<128x64xf32>
    %47 = arith.mulf %37, %46 : vector<128x64xf32>
    %48 = vector.broadcast %28 : vector<1x64xf32> to vector<128x64xf32>
    %49 = arith.mulf %47, %48 : vector<128x64xf32>
    %50 = arith.addf %0, %49 : vector<128x64xf32>
    %c0_22 = arith.constant 0 : index
    %c0_23 = arith.constant 0 : index
    %51 = vector.load %arg6[%c0_22, %c0_23] : memref<64x512xf32, #tpu.memory_space<vmem>>, vector<64x512xf32>
    %cst_24 = arith.constant dense<0.000000e+00> : vector<128x512xf32>
    %52 = tpu.matmul %50, %51, %cst_24 {dimension_numbers = #tpu.dot_dimension_numbers<[1], [0], [0], [1], [0, 0, 1, 1], [], []>} : vector<128x64xf32>, vector<64x512xf32>, vector<128x512xf32> -> vector<128x512xf32>
    %c0_25 = arith.constant 0 : index
    %c0_26 = arith.constant 0 : index
    %53 = vector.load %arg7[%c0_25, %c0_26] : memref<1x512xf32, #tpu.memory_space<vmem>>, vector<1x512xf32>
    %54 = vector.broadcast %53 : vector<1x512xf32> to vector<128x512xf32>
    %55 = arith.addf %52, %54 : vector<128x512xf32>
    %56 = vector.extract_strided_slice %55 {offsets = [0, 0], sizes = [128, 256], strides = [1, 1]} : vector<128x512xf32> to vector<128x256xf32>
    %57 = vector.extract_strided_slice %55 {offsets = [0, 256], sizes = [128, 256], strides = [1, 1]} : vector<128x512xf32> to vector<128x256xf32>
    %58 = arith.negf %56 : vector<128x256xf32>
    %59 = math.exp %58 : vector<128x256xf32>
    %cst_27 = arith.constant 1.000000e+00 : f32
    %60 = vector.broadcast %cst_27 : f32 to vector<128x256xf32>
    %61 = arith.addf %60, %59 : vector<128x256xf32>
    %62 = arith.divf %60, %61 : vector<128x256xf32>
    %63 = arith.mulf %56, %62 : vector<128x256xf32>
    %64 = arith.mulf %63, %57 : vector<128x256xf32>
    %c0_28 = arith.constant 0 : index
    %c0_29 = arith.constant 0 : index
    %65 = vector.load %arg8[%c0_28, %c0_29] : memref<256x64xf32, #tpu.memory_space<vmem>>, vector<256x64xf32>
    %cst_30 = arith.constant dense<0.000000e+00> : vector<128x64xf32>
    %66 = tpu.matmul %64, %65, %cst_30 {dimension_numbers = #tpu.dot_dimension_numbers<[1], [0], [0], [1], [0, 0, 1, 1], [], []>} : vector<128x256xf32>, vector<256x64xf32>, vector<128x64xf32> -> vector<128x64xf32>
    %67 = vector.broadcast %29 : vector<1x64xf32> to vector<128x64xf32>
    %68 = arith.addf %66, %67 : vector<128x64xf32>
    %69 = arith.addf %50, %68 : vector<128x64xf32>
    %70 = arith.mulf %69, %69 : vector<128x64xf32>
    %cst_31 = arith.constant dense<0.000000e+00> : vector<128xf32>
    %71 = vector.multi_reduction <add>, %70, %cst_31 [1] : vector<128x64xf32> to vector<128xf32>
    %72 = vector.shape_cast %71 : vector<128xf32> to vector<128x1xf32>
    %cst_32 = arith.constant 6.400000e+01 : f32
    %73 = vector.broadcast %cst_32 : f32 to vector<128x1xf32>
    %74 = arith.divf %72, %73 : vector<128x1xf32>
    %cst_33 = arith.constant 1.1920929E-7 : f32
    %75 = vector.broadcast %cst_33 : f32 to vector<128x1xf32>
    %76 = arith.addf %74, %75 : vector<128x1xf32>
    %77 = math.rsqrt %76 : vector<128x1xf32>
    %78 = vector.broadcast %77 : vector<128x1xf32> to vector<128x64xf32>
    %79 = arith.mulf %69, %78 : vector<128x64xf32>
    %80 = vector.broadcast %30 : vector<1x64xf32> to vector<128x64xf32>
    %81 = arith.mulf %79, %80 : vector<128x64xf32>
    %c0_34 = arith.constant 0 : index
    %c0_35 = arith.constant 0 : index
    %82 = vector.load %arg10[%c0_34, %c0_35] : memref<128x64xf32, #tpu.memory_space<vmem>>, vector<128x64xf32>
    tpu.vector_store %arg10[%c0_34, %c0_35], %81 {strides = array<i32>} : memref<128x64xf32, #tpu.memory_space<vmem>>, vector<128x64xf32>,
    return
  }
  func.func @transform_0(%arg0: i32) -> (i32, i32) {
    %c0_i32 = arith.constant 0 : i32
    %c0_i32_0 = arith.constant 0 : i32
    return %arg0, %c0_i32 : i32, i32
  }
  func.func @transform_1(%arg0: i32) -> (i32, i32) {
    %c0_i32 = arith.constant 0 : i32
    %c0_i32_0 = arith.constant 0 : i32
    %c0_i32_1 = arith.constant 0 : i32
    return %c0_i32, %c0_i32_0 : i32, i32
  }
  func.func @transform_2(%arg0: i32) -> (i32, i32) {
    %c0_i32 = arith.constant 0 : i32
    %c0_i32_0 = arith.constant 0 : i32
    %c0_i32_1 = arith.constant 0 : i32
    return %c0_i32, %c0_i32_0 : i32, i32
  }
  func.func @transform_3(%arg0: i32) -> (i32, i32) {
    %c0_i32 = arith.constant 0 : i32
    %c0_i32_0 = arith.constant 0 : i32
    %c0_i32_1 = arith.constant 0 : i32
    return %c0_i32, %c0_i32_0 : i32, i32
  }
  func.func @transform_4(%arg0: i32) -> (i32, i32) {
    %c0_i32 = arith.constant 0 : i32
    %c0_i32_0 = arith.constant 0 : i32
    %c0_i32_1 = arith.constant 0 : i32
    return %c0_i32, %c0_i32_0 : i32, i32
  }
  func.func @transform_5(%arg0: i32) -> (i32, i32) {
    %c0_i32 = arith.constant 0 : i32
    %c0_i32_0 = arith.constant 0 : i32
    %c0_i32_1 = arith.constant 0 : i32
    return %c0_i32, %c0_i32_0 : i32, i32
  }
  func.func @transform_6(%arg0: i32) -> (i32, i32) {
    %c0_i32 = arith.constant 0 : i32
    %c0_i32_0 = arith.constant 0 : i32
    %c0_i32_1 = arith.constant 0 : i32
    return %c0_i32, %c0_i32_0 : i32, i32
  }
  func.func @transform_7(%arg0: i32) -> (i32, i32) {
    %c0_i32 = arith.constant 0 : i32
    %c0_i32_0 = arith.constant 0 : i32
    %c0_i32_1 = arith.constant 0 : i32
    return %c0_i32, %c0_i32_0 : i32, i32
  }
  func.func @transform_8(%arg0: i32) -> (i32, i32) {
    %c0_i32 = arith.constant 0 : i32
    %c0_i32_0 = arith.constant 0 : i32
    %c0_i32_1 = arith.constant 0 : i32
    return %c0_i32, %c0_i32_0 : i32, i32
  }
  func.func @transform_9(%arg0: i32) -> (i32, i32) {
    %c0_i32 = arith.constant 0 : i32
    %c0_i32_0 = arith.constant 0 : i32
    return %arg0, %c0_i32 : i32, i32
  }
}

</mosaic_0001>

<llo_original>
// kernel: tpu_custom_call.1
$region0: #{tpu_custom_call.1}
  #allocation0 [shape = 'u32[]', space=smem, size = 0x4, offset = 0x4, fixed_abs, tag = 'smem constant byte address 0x4 - core index']
  #allocation1 [shape = 'u32[72,128]{1,0:T(1,128)}', space=vmem, size = 0x9000, scoped, tag = 'internal scratch']
  %s0 = inlined_call_operand.vmem [shape: f32[128,64], index: 0, kind: input, shape index: {}]
  %s1 = inlined_call_operand.vmem [shape: bf16[64,48], index: 1, kind: input, shape index: {}]
  %s2 = inlined_call_operand.vmem [shape: f32[1,48], index: 2, kind: input, shape index: {}]
  %s3 = inlined_call_operand.vmem [shape: bf16[64,64], index: 3, kind: input, shape index: {}]
  %s4 = inlined_call_operand.vmem [shape: bf16[16,64], index: 4, kind: input, shape index: {}]
  %s5 = inlined_call_operand.vmem [shape: f32[64,512], index: 5, kind: input, shape index: {}]
  %s6 = inlined_call_operand.vmem [shape: f32[1,512], index: 6, kind: input, shape index: {}]
  %s7 = inlined_call_operand.vmem [shape: f32[256,64], index: 7, kind: input, shape index: {}]
  %s8 = inlined_call_operand.vmem [shape: f32[4,64], index: 8, kind: input, shape index: {}]
  %s9 = inlined_call_operand.vmem [shape: f32[128,64], index: 9, kind: output, shape index: {}]
  %s10 = sld [smem:[#allocation0]]
  $region46: #{tpu_custom_call.1} parent=0
    _
  %s12 = ssub.s32 1, %s10
  %s13 = scalar_select 0, %s12, %s10
  // Predicated region
  $region2: #{tpu_custom_call.1} parent=0 // pred_check
    _
  $region3: #{tpu_custom_call.1} parent=0 // pred_check_branch
    %15 = sbr.rel (0) target = $region5
  $region4: #{tpu_custom_call.1} parent=0 // pred_region
    _
  $region5: #{tpu_custom_call.1} parent=0 // pred_fallthru
    _
  // Predicated region
  $region6: #{tpu_custom_call.1} parent=0 // pred_check
    _
  $region7: #{tpu_custom_call.1} parent=0 // pred_check_branch
    %17 = sbr.rel (0) target = $region9
  $region8: #{tpu_custom_call.1} parent=0 // pred_region
    _
  $region9: #{tpu_custom_call.1} parent=0 // pred_fallthru
    _
  // Predicated region
  $region10: #{tpu_custom_call.1} parent=0 // pred_check
    _
  $region11: #{tpu_custom_call.1} parent=0 // pred_check_branch
    %19 = sbr.rel (0) target = $region13
  $region12: #{tpu_custom_call.1} parent=0 // pred_region
    _
  $region13: #{tpu_custom_call.1} parent=0 // pred_fallthru
    _
  // Predicated region
  $region14: #{tpu_custom_call.1} parent=0 // pred_check
    _
  $region15: #{tpu_custom_call.1} parent=0 // pred_check_branch
    %21 = sbr.rel (0) target = $region17
  $region16: #{tpu_custom_call.1} parent=0 // pred_region
    _
  $region17: #{tpu_custom_call.1} parent=0 // pred_fallthru
    _
  // Predicated region
  $region18: #{tpu_custom_call.1} parent=0 // pred_check
    _
  $region19: #{tpu_custom_call.1} parent=0 // pred_check_branch
    %23 = sbr.rel (0) target = $region21
  $region20: #{tpu_custom_call.1} parent=0 // pred_region
    _
  $region21: #{tpu_custom_call.1} parent=0 // pred_fallthru
    _
  // Predicated region
  $region22: #{tpu_custom_call.1} parent=0 // pred_check
    _
  $region23: #{tpu_custom_call.1} parent=0 // pred_check_branch
    %25 = sbr.rel (0) target = $region25
  $region24: #{tpu_custom_call.1} parent=0 // pred_region
    _
  $region25: #{tpu_custom_call.1} parent=0 // pred_fallthru
    _
  // Predicated region
  $region26: #{tpu_custom_call.1} parent=0 // pred_check
    _
  $region27: #{tpu_custom_call.1} parent=0 // pred_check_branch
    %27 = sbr.rel (0) target = $region29
  $region28: #{tpu_custom_call.1} parent=0 // pred_region
    _
  $region29: #{tpu_custom_call.1} parent=0 // pred_fallthru
    _
  // Predicated region
  $region30: #{tpu_custom_call.1} parent=0 // pred_check
    _
  $region31: #{tpu_custom_call.1} parent=0 // pred_check_branch
    %29 = sbr.rel (0) target = $region33
  $region32: #{tpu_custom_call.1} parent=0 // pred_region
    _
  $region33: #{tpu_custom_call.1} parent=0 // pred_fallthru
    _
  // Predicated region
  $region34: #{tpu_custom_call.1} parent=0 // pred_check
    _
  $region35: #{tpu_custom_call.1} parent=0 // pred_check_branch
    %31 = sbr.rel (0) target = $region37
  $region36: #{tpu_custom_call.1} parent=0 // pred_region
    _
  $region37: #{tpu_custom_call.1} parent=0 // pred_fallthru
    _
  %v33 = vld [vmem:[%s0] sm:$0xff]
  %v34 = vld [vmem:[%s0 + $0x8] sm:$0xff]
  %v35 = vld [vmem:[%s0 + $0x10] sm:$0xff]
  %v36 = vld [vmem:[%s0 + $0x18] sm:$0xff]
  %v37 = vld [vmem:[%s0 + $0x20] sm:$0xff]
  %v38 = vld [vmem:[%s0 + $0x28] sm:$0xff]
  %v39 = vld [vmem:[%s0 + $0x30] sm:$0xff]
  %v40 = vld [vmem:[%s0 + $0x38] sm:$0xff]
  %v41 = vld [vmem:[%s0 + $0x40] sm:$0xff]
  %v42 = vld [vmem:[%s0 + $0x48] sm:$0xff]
  %v43 = vld [vmem:[%s0 + $0x50] sm:$0xff]
  %v44 = vld [vmem:[%s0 + $0x58] sm:$0xff]
  %v45 = vld [vmem:[%s0 + $0x60] sm:$0xff]
  %v46 = vld [vmem:[%s0 + $0x68] sm:$0xff]
  %v47 = vld [vmem:[%s0 + $0x70] sm:$0xff]
  %v48 = vld [vmem:[%s0 + $0x78] sm:$0xff]
  %v49 = vpack.c.bf16 %v34, %v33
  %v50 = vpack.c.bf16 %v36, %v35
  %v51 = vpack.c.bf16 %v38, %v37
  %v52 = vpack.c.bf16 %v40, %v39
  %v53 = vpack.c.bf16 %v42, %v41
  %v54 = vpack.c.bf16 %v44, %v43
  %v55 = vpack.c.bf16 %v46, %v45
  %v56 = vpack.c.bf16 %v48, %v47
  %v57 = vld [vmem:[%s1] sm:$0xf]
  %v58 = vld [vmem:[%s1 + $0x4] sm:$0xf]
  %v59 = vld [vmem:[%s1 + $0x8] sm:$0xf]
  %v60 = vld [vmem:[%s1 + $0xc] sm:$0xf]
  %v61 = vld [vmem:[%s1 + $0x10] sm:$0xf]
  %v62 = vld [vmem:[%s1 + $0x14] sm:$0xf]
  %v63 = vld [vmem:[%s1 + $0x18] sm:$0xf]
  %v64 = vld [vmem:[%s1 + $0x1c] sm:$0xf]
  %v65 = vld [vmem:[%s2] sm:$0x1]
  %v67 = vperm.slane %v65, 0
  %v77 = vunpack.c.l.b16 %v57
  %v78 = vunpack.c.l.b16 %v58
  %v79 = vunpack.c.l.b16 %v59
  %v80 = vunpack.c.l.b16 %v60
  %v81 = vunpack.c.l.b16 %v61
  %v82 = vunpack.c.l.b16 %v62
  %v83 = vunpack.c.l.b16 %v63
  %v84 = vunpack.c.l.b16 %v64
  %v85 = vpack.c.b16 %v78, %v77
  %v86 = vpack.c.b16 %v80, %v79
  %v87 = vpack.c.b16 %v82, %v81
  %v88 = vpack.c.b16 %v84, %v83
  %vm93 = vcmask 523264
  %v95 = vsel %vm93, %v49, 0
  %v98 = vsel %vm93, %v50, 0
  %v101 = vsel %vm93, %v51, 0
  %v104 = vsel %vm93, %v52, 0
  %v107 = vsel %vm93, %v53, 0
  %v110 = vsel %vm93, %v54, 0
  %v113 = vsel %vm93, %v55, 0
  %v116 = vsel %vm93, %v56, 0
  %118 = vmatpush.bf16.msra.mxu0 0
  %119 = vmatpush.bf16.msra.mxu0 0
  %120 = vmatpush.bf16.msra.mxu0 0
  %121 = vmatpush.bf16.msra.mxu0 0
  %122 = vmatpush.bf16.msra.mxu0 %v88
  %123 = vmatpush.bf16.msra.mxu0 %v87
  %124 = vmatpush.bf16.msra.mxu0 %v86
  %125 = vmatpush.bf16.msra.mxu0 %v85
  %126 = vmatmul.bf16.gmra.mxu0 %v95
  %v127 = vpop.f32.mrf.mxu0
  %v128 = vadd.f32 %v67, %v127
  %v129 = vpop.f32.mrf.mxu0
  %v130 = vadd.f32 %v67, %v129
  %131 = vmatmul.bf16.gmra.mxu0 %v98
  %v132 = vpop.f32.mrf.mxu0
  %v133 = vadd.f32 %v67, %v132
  %v134 = vpop.f32.mrf.mxu0
  %v135 = vadd.f32 %v67, %v134
  %136 = vmatmul.bf16.gmra.mxu0 %v101
  %v137 = vpop.f32.mrf.mxu0
  %v138 = vadd.f32 %v67, %v137
  %v139 = vpop.f32.mrf.mxu0
  %v140 = vadd.f32 %v67, %v139
  %141 = vmatmul.bf16.gmra.mxu0 %v104
  %v142 = vpop.f32.mrf.mxu0
  %v143 = vadd.f32 %v67, %v142
  %v144 = vpop.f32.mrf.mxu0
  %v145 = vadd.f32 %v67, %v144
  %146 = vmatmul.bf16.gmra.mxu0 %v107
  %v147 = vpop.f32.mrf.mxu0
  %v148 = vadd.f32 %v67, %v147
  %v149 = vpop.f32.mrf.mxu0
  %v150 = vadd.f32 %v67, %v149
  %151 = vmatmul.bf16.gmra.mxu0 %v110
  %v152 = vpop.f32.mrf.mxu0
  %v153 = vadd.f32 %v67, %v152
  %v154 = vpop.f32.mrf.mxu0
  %v155 = vadd.f32 %v67, %v154
  %156 = vmatmul.bf16.gmra.mxu0 %v113
  %v157 = vpop.f32.mrf.mxu0
  %v158 = vadd.f32 %v67, %v157
  %v159 = vpop.f32.mrf.mxu0
  %v160 = vadd.f32 %v67, %v159
  %161 = vmatmul.bf16.gmra.mxu0 %v116
  %v162 = vpop.f32.mrf.mxu0
  %v163 = vadd.f32 %v67, %v162
  %v164 = vpop.f32.mrf.mxu0
  %v165 = vadd.f32 %v67, %v164
  %166 = vdwg.mxu0
  %v167 = vpack.c.bf16 %v128, %v128
  %v168 = vpack.c.bf16 %v130, %v130
  %v169 = vpack.c.bf16 %v133, %v133
  %v170 = vpack.c.bf16 %v135, %v135
  %v171 = vpack.c.bf16 %v138, %v138
  %v172 = vpack.c.bf16 %v140, %v140
  %v173 = vpack.c.bf16 %v143, %v143
  %v174 = vpack.c.bf16 %v145, %v145
  %v175 = vpack.c.bf16 %v148, %v148
  %v176 = vpack.c.bf16 %v150, %v150
  %v177 = vpack.c.bf16 %v153, %v153
  %v178 = vpack.c.bf16 %v155, %v155
  %v179 = vpack.c.bf16 %v158, %v158
  %v180 = vpack.c.bf16 %v160, %v160
  %v181 = vpack.c.bf16 %v163, %v163
  %v182 = vpack.c.bf16 %v165, %v165
  %v183 = vld [vmem:[%s3] sm:$0xf]
  %v184 = vld [vmem:[%s3 + $0x4] sm:$0xf]
  %v185 = vld [vmem:[%s3 + $0x8] sm:$0xf]
  %v186 = vld [vmem:[%s3 + $0xc] sm:$0xf]
  %v187 = vld [vmem:[%s3 + $0x10] sm:$0xf]
  %v188 = vld [vmem:[%s3 + $0x14] sm:$0xf]
  %v189 = vld [vmem:[%s3 + $0x18] sm:$0xf]
  %v190 = vld [vmem:[%s3 + $0x1c] sm:$0xf]
  %v199 = vunpack.c.l.b16 %v167
  %v200 = vunpack.c.l.b16 %v168
  %v201 = vunpack.c.l.b16 %v169
  %v202 = vunpack.c.l.b16 %v170
  %v203 = vunpack.c.l.b16 %v171
  %v204 = vunpack.c.l.b16 %v172
  %v205 = vunpack.c.l.b16 %v173
  %v206 = vunpack.c.l.b16 %v174
  %v207 = vpack.c.b16 %v200, %v199
  %v208 = vpack.c.b16 %v202, %v201
  %v209 = vpack.c.b16 %v204, %v203
  %v210 = vpack.c.b16 %v206, %v205
  %211 = vrot.lane.b32.xlu0 %v207, 96
  %v212 = vpop.permute.xlu0 %211
  %213 = vrot.lane.b32.xlu0 %v208, 96
  %v214 = vpop.permute.xlu0 %213
  %215 = vrot.lane.b32.xlu0 %v209, 96
  %v216 = vpop.permute.xlu0 %215
  %217 = vrot.lane.b32.xlu0 %v210, 96
  %v218 = vpop.permute.xlu0 %217
  %vm219 = vcmask 130048
  %v221 = vsel %vm219, %v207, 0
  %v224 = vsel %vm219, %v208, 0
  %v227 = vsel %vm219, %v209, 0
  %v230 = vsel %vm219, %v210, 0
  %v233 = vsel %vm219, %v212, 0
  %v236 = vsel %vm219, %v214, 0
  %v239 = vsel %vm219, %v216, 0
  %v242 = vsel %vm219, %v218, 0
  %244 = vmatpush.bf16.xpose.msra.mxu0 0
  %245 = vmatpush.bf16.xpose.msra.mxu0 0
  %246 = vmatpush.bf16.xpose.msra.mxu0 0
  %247 = vmatpush.bf16.xpose.msra.mxu0 0
  %248 = vmatpush.bf16.xpose.msra.mxu0 %v242
  %249 = vmatpush.bf16.xpose.msra.mxu0 %v239
  %250 = vmatpush.bf16.xpose.msra.mxu0 %v236
  %251 = vmatpush.bf16.xpose.msra.mxu0 %v233
  %252 = vmatmul.bf16.gmra.mxu0 %v221
  %v253 = vpop.f32.mrf.mxu0
  %v254 = vadd.f32 0.0, %v253
  %v255 = vpop.f32.mrf.mxu0
  %v256 = vadd.f32 0.0, %v255
  %257 = vmatmul.bf16.gmra.mxu0 %v224
  %v258 = vpop.f32.mrf.mxu0
  %v259 = vadd.f32 0.0, %v258
  %v260 = vpop.f32.mrf.mxu0
  %v261 = vadd.f32 0.0, %v260
  %262 = vmatmul.bf16.gmra.mxu0 %v227
  %v263 = vpop.f32.mrf.mxu0
  %v264 = vadd.f32 0.0, %v263
  %v265 = vpop.f32.mrf.mxu0
  %v266 = vadd.f32 0.0, %v265
  %267 = vmatmul.bf16.gmra.mxu0 %v230
  %v268 = vpop.f32.mrf.mxu0
  %v269 = vadd.f32 0.0, %v268
  %v270 = vpop.f32.mrf.mxu0
  %v271 = vadd.f32 0.0, %v270
  %272 = vdwg.mxu0
  %v273 = vpack.c.bf16 %v254, %v254
  %v274 = vpack.c.bf16 %v256, %v256
  %v275 = vpack.c.bf16 %v259, %v259
  %v276 = vpack.c.bf16 %v261, %v261
  %v277 = vpack.c.bf16 %v264, %v264
  %v278 = vpack.c.bf16 %v266, %v266
  %v279 = vpack.c.bf16 %v269, %v269
  %v280 = vpack.c.bf16 %v271, %v271
  %v281 = vunpack.c.l.bf16 %v273
  %v282 = vunpack.c.l.bf16 %v274
  %v283 = vunpack.c.l.bf16 %v275
  %v284 = vunpack.c.l.bf16 %v276
  %v285 = vunpack.c.l.bf16 %v277
  %v286 = vunpack.c.l.bf16 %v278
  %v287 = vunpack.c.l.bf16 %v279
  %v288 = vunpack.c.l.bf16 %v280
  %v289 = vunpack.c.l.bf16 %v183
  %v290 = vunpack.c.l.bf16 %v184
  %v291 = vunpack.c.l.bf16 %v185
  %v292 = vunpack.c.l.bf16 %v186
  %v293 = vunpack.c.l.bf16 %v187
  %v294 = vunpack.c.l.bf16 %v188
  %v295 = vunpack.c.l.bf16 %v189
  %v296 = vunpack.c.l.bf16 %v190
  %v297 = vmul.f32 %v281, %v289
  %v298 = vmul.f32 %v282, %v290
  %v299 = vmul.f32 %v283, %v291
  %v300 = vmul.f32 %v284, %v292
  %v301 = vmul.f32 %v285, %v293
  %v302 = vmul.f32 %v286, %v294
  %v303 = vmul.f32 %v287, %v295
  %v304 = vmul.f32 %v288, %v296
  %v305 = vpack.c.bf16 %v298, %v297
  %v306 = vpack.c.bf16 %v300, %v299
  %v307 = vpack.c.bf16 %v302, %v301
  %v308 = vpack.c.bf16 %v304, %v303
  %309 = vrot.lane.b32.xlu0 %v207, 112
  %v310 = vpop.permute.xlu0 %309
  %311 = vrot.lane.b32.xlu0 %v208, 112
  %v312 = vpop.permute.xlu0 %311
  %313 = vrot.lane.b32.xlu0 %v209, 112
  %v314 = vpop.permute.xlu0 %313
  %315 = vrot.lane.b32.xlu0 %v210, 112
  %v316 = vpop.permute.xlu0 %315
  %v322 = vsel %vm93, %v305, 0
  %v325 = vsel %vm93, %v306, 0
  %v328 = vsel %vm93, %v307, 0
  %v331 = vsel %vm93, %v308, 0
  %333 = vmatpush.bf16.msra.mxu0 0
  %334 = vmatpush.bf16.msra.mxu0 0
  %335 = vmatpush.bf16.msra.mxu0 0
  %336 = vmatpush.bf16.msra.mxu0 0
  %337 = vmatpush.bf16.msra.mxu0 %v316
  %338 = vmatpush.bf16.msra.mxu0 %v314
  %339 = vmatpush.bf16.msra.mxu0 %v312
  %340 = vmatpush.bf16.msra.mxu0 %v310
  %341 = vmatmul.bf16.gmra.mxu0 %v322
  %v342 = vpop.f32.mrf.mxu0
  %v343 = vadd.f32 0.0, %v342
  %v344 = vpop.f32.mrf.mxu0
  %v345 = vadd.f32 0.0, %v344
  %346 = vmatmul.bf16.gmra.mxu0 %v325
  %v347 = vpop.f32.mrf.mxu0
  %v348 = vadd.f32 0.0, %v347
  %v349 = vpop.f32.mrf.mxu0
  %v350 = vadd.f32 0.0, %v349
  %351 = vmatmul.bf16.gmra.mxu0 %v328
  %v352 = vpop.f32.mrf.mxu0
  %v353 = vadd.f32 0.0, %v352
  %v354 = vpop.f32.mrf.mxu0
  %v355 = vadd.f32 0.0, %v354
  %356 = vmatmul.bf16.gmra.mxu0 %v331
  %v357 = vpop.f32.mrf.mxu0
  %v358 = vadd.f32 0.0, %v357
  %v359 = vpop.f32.mrf.mxu0
  %v360 = vadd.f32 0.0, %v359
  %361 = vdwg.mxu0
  %v370 = vunpack.c.l.b16 %v175
  %v371 = vunpack.c.l.b16 %v176
  %v372 = vunpack.c.l.b16 %v177
  %v373 = vunpack.c.l.b16 %v178
  %v374 = vunpack.c.l.b16 %v179
  %v375 = vunpack.c.l.b16 %v180
  %v376 = vunpack.c.l.b16 %v181
  %v377 = vunpack.c.l.b16 %v182
  %v378 = vpack.c.b16 %v371, %v370
  %v379 = vpack.c.b16 %v373, %v372
  %v380 = vpack.c.b16 %v375, %v374
  %v381 = vpack.c.b16 %v377, %v376
  %382 = vrot.lane.b32.xlu0 %v378, 96
  %v383 = vpop.permute.xlu0 %382
  %384 = vrot.lane.b32.xlu0 %v379, 96
  %v385 = vpop.permute.xlu0 %384
  %386 = vrot.lane.b32.xlu0 %v380, 96
  %v387 = vpop.permute.xlu0 %386
  %388 = vrot.lane.b32.xlu0 %v381, 96
  %v389 = vpop.permute.xlu0 %388
  %v391 = vsel %vm219, %v378, 0
  %v394 = vsel %vm219, %v379, 0
  %v397 = vsel %vm219, %v380, 0
  %v400 = vsel %vm219, %v381, 0
  %v403 = vsel %vm219, %v383, 0
  %v406 = vsel %vm219, %v385, 0
  %v409 = vsel %vm219, %v387, 0
  %v412 = vsel %vm219, %v389, 0
  %414 = vmatpush.bf16.xpose.msra.mxu0 0
  %415 = vmatpush.bf16.xpose.msra.mxu0 0
  %416 = vmatpush.bf16.xpose.msra.mxu0 0
  %417 = vmatpush.bf16.xpose.msra.mxu0 0
  %418 = vmatpush.bf16.xpose.msra.mxu0 %v412
  %419 = vmatpush.bf16.xpose.msra.mxu0 %v409
  %420 = vmatpush.bf16.xpose.msra.mxu0 %v406
  %421 = vmatpush.bf16.xpose.msra.mxu0 %v403
  %422 = vmatmul.bf16.gmra.mxu0 %v391
  %v423 = vpop.f32.mrf.mxu0
  %v424 = vadd.f32 0.0, %v423
  %v425 = vpop.f32.mrf.mxu0
  %v426 = vadd.f32 0.0, %v425
  %427 = vmatmul.bf16.gmra.mxu0 %v394
  %v428 = vpop.f32.mrf.mxu0
  %v429 = vadd.f32 0.0, %v428
  %v430 = vpop.f32.mrf.mxu0
  %v431 = vadd.f32 0.0, %v430
  %432 = vmatmul.bf16.gmra.mxu0 %v397
  %v433 = vpop.f32.mrf.mxu0
  %v434 = vadd.f32 0.0, %v433
  %v435 = vpop.f32.mrf.mxu0
  %v436 = vadd.f32 0.0, %v435
  %437 = vmatmul.bf16.gmra.mxu0 %v400
  %v438 = vpop.f32.mrf.mxu0
  %v439 = vadd.f32 0.0, %v438
  %v440 = vpop.f32.mrf.mxu0
  %v441 = vadd.f32 0.0, %v440
  %442 = vdwg.mxu0
  %v443 = vpack.c.bf16 %v424, %v424
  %v444 = vpack.c.bf16 %v426, %v426
  %v445 = vpack.c.bf16 %v429, %v429
  %v446 = vpack.c.bf16 %v431, %v431
  %v447 = vpack.c.bf16 %v434, %v434
  %v448 = vpack.c.bf16 %v436, %v436
  %v449 = vpack.c.bf16 %v439, %v439
  %v450 = vpack.c.bf16 %v441, %v441
  %v451 = vunpack.c.l.bf16 %v443
  %v452 = vunpack.c.l.bf16 %v444
  %v453 = vunpack.c.l.bf16 %v445
  %v454 = vunpack.c.l.bf16 %v446
  %v455 = vunpack.c.l.bf16 %v447
  %v456 = vunpack.c.l.bf16 %v448
  %v457 = vunpack.c.l.bf16 %v449
  %v458 = vunpack.c.l.bf16 %v450
  %v459 = vmul.f32 %v451, %v289
  %v460 = vmul.f32 %v452, %v290
  %v461 = vmul.f32 %v453, %v291
  %v462 = vmul.f32 %v454, %v292
  %v463 = vmul.f32 %v455, %v293
  %v464 = vmul.f32 %v456, %v294
  %v465 = vmul.f32 %v457, %v295
  %v466 = vmul.f32 %v458, %v296
  %v467 = vpack.c.bf16 %v460, %v459
  %v468 = vpack.c.bf16 %v462, %v461
  %v469 = vpack.c.bf16 %v464, %v463
  %v470 = vpack.c.bf16 %v466, %v465
  %471 = vrot.lane.b32.xlu0 %v378, 112
  %v472 = vpop.permute.xlu0 %471
  %473 = vrot.lane.b32.xlu0 %v379, 112
  %v474 = vpop.permute.xlu0 %473
  %475 = vrot.lane.b32.xlu0 %v380, 112
  %v476 = vpop.permute.xlu0 %475
  %477 = vrot.lane.b32.xlu0 %v381, 112
  %v478 = vpop.permute.xlu0 %477
  %v484 = vsel %vm93, %v467, 0
  %v487 = vsel %vm93, %v468, 0
  %v490 = vsel %vm93, %v469, 0
  %v493 = vsel %vm93, %v470, 0
  %495 = vmatpush.bf16.msra.mxu0 0
  %496 = vmatpush.bf16.msra.mxu0 0
  %497 = vmatpush.bf16.msra.mxu0 0
  %498 = vmatpush.bf16.msra.mxu0 0
  %499 = vmatpush.bf16.msra.mxu0 %v478
  %500 = vmatpush.bf16.msra.mxu0 %v476
  %501 = vmatpush.bf16.msra.mxu0 %v474
  %502 = vmatpush.bf16.msra.mxu0 %v472
  %503 = vmatmul.bf16.gmra.mxu0 %v484
  %v504 = vpop.f32.mrf.mxu0
  %v505 = vadd.f32 0.0, %v504
  %v506 = vpop.f32.mrf.mxu0
  %v507 = vadd.f32 0.0, %v506
  %508 = vmatmul.bf16.gmra.mxu0 %v487
  %v509 = vpop.f32.mrf.mxu0
  %v510 = vadd.f32 0.0, %v509
  %v511 = vpop.f32.mrf.mxu0
  %v512 = vadd.f32 0.0, %v511
  %513 = vmatmul.bf16.gmra.mxu0 %v490
  %v514 = vpop.f32.mrf.mxu0
  %v515 = vadd.f32 0.0, %v514
  %v516 = vpop.f32.mrf.mxu0
  %v517 = vadd.f32 0.0, %v516
  %518 = vmatmul.bf16.gmra.mxu0 %v493
  %v519 = vpop.f32.mrf.mxu0
  %v520 = vadd.f32 0.0, %v519
  %v521 = vpop.f32.mrf.mxu0
  %v522 = vadd.f32 0.0, %v521
  %523 = vdwg.mxu0
  %v524 = vld [vmem:[%s8] sm:$0x1]
  %v525 = vld [vmem:[%s8 + $0x1] sm:$0x1]
  %v526 = vld [vmem:[%s8 + $0x2] sm:$0x1]
  %v527 = vld [vmem:[%s8 + $0x3] sm:$0x1]
  %v528 = vpack.c.bf16 %v345, %v343
  %v529 = vpack.c.bf16 %v350, %v348
  %v530 = vpack.c.bf16 %v355, %v353
  %v531 = vpack.c.bf16 %v360, %v358
  %v532 = vpack.c.bf16 %v507, %v505
  %v533 = vpack.c.bf16 %v512, %v510
  %v534 = vpack.c.bf16 %v517, %v515
  %v535 = vpack.c.bf16 %v522, %v520
  %v536 = vld [vmem:[%s4] sm:$0xf]
  %v537 = vld [vmem:[%s4 + $0x4] sm:$0xf]
  %v538 = vperm.slane %v524, 0
  %v541 = vunpack.c.l.b16 %v536
  %v542 = vunpack.c.l.b16 %v537
  %v543 = vpack.c.b16 %v542, %v541
  %v546 = vsel %vm219, %v528, 0
  %v549 = vsel %vm219, %v529, 0
  %v552 = vsel %vm219, %v530, 0
  %v555 = vsel %vm219, %v531, 0
  %v558 = vsel %vm219, %v532, 0
  %v561 = vsel %vm219, %v533, 0
  %v564 = vsel %vm219, %v534, 0
  %v567 = vsel %vm219, %v535, 0
  %569 = vmatpush.bf16.msra.mxu0 0
  %570 = vmatpush.bf16.msra.mxu0 0
  %571 = vmatpush.bf16.msra.mxu0 0
  %572 = vmatpush.bf16.msra.mxu0 0
  %573 = vmatpush.bf16.msra.mxu0 0
  %574 = vmatpush.bf16.msra.mxu0 0
  %575 = vmatpush.bf16.msra.mxu0 0
  %576 = vmatpush.bf16.msra.mxu0 %v543
  %577 = vmatmul.bf16.gmra.mxu0 %v546
  %v578 = vpop.f32.mrf.mxu0
  %v579 = vadd.f32 %v538, %v578
  %v580 = vpop.f32.mrf.mxu0
  %v581 = vadd.f32 %v538, %v580
  %582 = vmatmul.bf16.gmra.mxu0 %v549
  %v583 = vpop.f32.mrf.mxu0
  %v584 = vadd.f32 %v538, %v583
  %v585 = vpop.f32.mrf.mxu0
  %v586 = vadd.f32 %v538, %v585
  %587 = vmatmul.bf16.gmra.mxu0 %v552
  %v588 = vpop.f32.mrf.mxu0
  %v589 = vadd.f32 %v538, %v588
  %v590 = vpop.f32.mrf.mxu0
  %v591 = vadd.f32 %v538, %v590
  %592 = vmatmul.bf16.gmra.mxu0 %v555
  %v593 = vpop.f32.mrf.mxu0
  %v594 = vadd.f32 %v538, %v593
  %v595 = vpop.f32.mrf.mxu0
  %v596 = vadd.f32 %v538, %v595
  %597 = vmatmul.bf16.gmra.mxu0 %v558
  %v598 = vpop.f32.mrf.mxu0
  %v599 = vadd.f32 %v538, %v598
  %v600 = vpop.f32.mrf.mxu0
  %v601 = vadd.f32 %v538, %v600
  %602 = vmatmul.bf16.gmra.mxu0 %v561
  %v603 = vpop.f32.mrf.mxu0
  %v604 = vadd.f32 %v538, %v603
  %v605 = vpop.f32.mrf.mxu0
  %v606 = vadd.f32 %v538, %v605
  %607 = vmatmul.bf16.gmra.mxu0 %v564
  %v608 = vpop.f32.mrf.mxu0
  %v609 = vadd.f32 %v538, %v608
  %v610 = vpop.f32.mrf.mxu0
  %v611 = vadd.f32 %v538, %v610
  %612 = vmatmul.bf16.gmra.mxu0 %v567
  %v613 = vpop.f32.mrf.mxu0
  %v614 = vadd.f32 %v538, %v613
  %v615 = vpop.f32.mrf.mxu0
  %v616 = vadd.f32 %v538, %v615
  %617 = vdwg.mxu0
  %v618 = vpack.c.bf16 %v579, %v579
  %v619 = vpack.c.bf16 %v581, %v581
  %v620 = vpack.c.bf16 %v584, %v584
  %v621 = vpack.c.bf16 %v586, %v586
  %v622 = vpack.c.bf16 %v589, %v589
  %v623 = vpack.c.bf16 %v591, %v591
  %v624 = vpack.c.bf16 %v594, %v594
  %v625 = vpack.c.bf16 %v596, %v596
  %v626 = vpack.c.bf16 %v599, %v599
  %v627 = vpack.c.bf16 %v601, %v601
  %v628 = vpack.c.bf16 %v604, %v604
  %v629 = vpack.c.bf16 %v606, %v606
  %v630 = vpack.c.bf16 %v609, %v609
  %v631 = vpack.c.bf16 %v611, %v611
  %v632 = vpack.c.bf16 %v614, %v614
  %v633 = vpack.c.bf16 %v616, %v616
  %v634 = vunpack.c.l.bf16 %v618
  %v635 = vunpack.c.l.bf16 %v619
  %v636 = vunpack.c.l.bf16 %v620
  %v637 = vunpack.c.l.bf16 %v621
  %v638 = vunpack.c.l.bf16 %v622
  %v639 = vunpack.c.l.bf16 %v623
  %v640 = vunpack.c.l.bf16 %v624
  %v641 = vunpack.c.l.bf16 %v625
  %v642 = vunpack.c.l.bf16 %v626
  %v643 = vunpack.c.l.bf16 %v627
  %v644 = vunpack.c.l.bf16 %v628
  %v645 = vunpack.c.l.bf16 %v629
  %v646 = vunpack.c.l.bf16 %v630
  %v647 = vunpack.c.l.bf16 %v631
  %v648 = vunpack.c.l.bf16 %v632
  %v649 = vunpack.c.l.bf16 %v633
  %v650 = vmul.f32 %v634, %v634
  %v651 = vmul.f32 %v635, %v635
  %v652 = vmul.f32 %v636, %v636
  %v653 = vmul.f32 %v637, %v637
  %v654 = vmul.f32 %v638, %v638
  %v655 = vmul.f32 %v639, %v639
  %v656 = vmul.f32 %v640, %v640
  %v657 = vmul.f32 %v641, %v641
  %v658 = vmul.f32 %v642, %v642
  %v659 = vmul.f32 %v643, %v643
  %v660 = vmul.f32 %v644, %v644
  %v661 = vmul.f32 %v645, %v645
  %v662 = vmul.f32 %v646, %v646
  %v663 = vmul.f32 %v647, %v647
  %v664 = vmul.f32 %v648, %v648
  %v665 = vmul.f32 %v649, %v649
  %v666 = vsel %vm93, %v650, 0.0
  %667 = vadd.xlane.f32.xlu0 %v666
  %v668 = vpop.xlane.xlu0 %667
  %v669 = vsel %vm93, %v651, 0.0
  %670 = vadd.xlane.f32.xlu0 %v669
  %v671 = vpop.xlane.xlu0 %670
  %v672 = vsel %vm93, %v652, 0.0
  %673 = vadd.xlane.f32.xlu0 %v672
  %v674 = vpop.xlane.xlu0 %673
  %v675 = vsel %vm93, %v653, 0.0
  %676 = vadd.xlane.f32.xlu0 %v675
  %v677 = vpop.xlane.xlu0 %676
  %v678 = vsel %vm93, %v654, 0.0
  %679 = vadd.xlane.f32.xlu0 %v678
  %v680 = vpop.xlane.xlu0 %679
  %v681 = vsel %vm93, %v655, 0.0
  %682 = vadd.xlane.f32.xlu0 %v681
  %v683 = vpop.xlane.xlu0 %682
  %v684 = vsel %vm93, %v656, 0.0
  %685 = vadd.xlane.f32.xlu0 %v684
  %v686 = vpop.xlane.xlu0 %685
  %v687 = vsel %vm93, %v657, 0.0
  %688 = vadd.xlane.f32.xlu0 %v687
  %v689 = vpop.xlane.xlu0 %688
  %v690 = vsel %vm93, %v658, 0.0
  %691 = vadd.xlane.f32.xlu0 %v690
  %v692 = vpop.xlane.xlu0 %691
  %v693 = vsel %vm93, %v659, 0.0
  %694 = vadd.xlane.f32.xlu0 %v693
  %v695 = vpop.xlane.xlu0 %694
  %v696 = vsel %vm93, %v660, 0.0
  %697 = vadd.xlane.f32.xlu0 %v696
  %v698 = vpop.xlane.xlu0 %697
  %v699 = vsel %vm93, %v661, 0.0
  %700 = vadd.xlane.f32.xlu0 %v699
  %v701 = vpop.xlane.xlu0 %700
  %v702 = vsel %vm93, %v662, 0.0
  %703 = vadd.xlane.f32.xlu0 %v702
  %v704 = vpop.xlane.xlu0 %703
  %v705 = vsel %vm93, %v663, 0.0
  %706 = vadd.xlane.f32.xlu0 %v705
  %v707 = vpop.xlane.xlu0 %706
  %v708 = vsel %vm93, %v664, 0.0
  %709 = vadd.xlane.f32.xlu0 %v708
  %v710 = vpop.xlane.xlu0 %709
  %v711 = vsel %vm93, %v665, 0.0
  %712 = vadd.xlane.f32.xlu0 %v711
  %v713 = vpop.xlane.xlu0 %712
  %v714 = vrcp.pop 64.0
  %v715 = vmul.f32 64.0, %v714
  %v716 = vsub.f32 1.0, %v715
  %v717 = vmul.f32 %v714, %v716
  %v718 = vadd.f32 %v714, %v717
  %vm719 = vweird.f32 %v714
  %v720 = vsel %vm719, %v714, %v718
  %v721 = vmul.f32 %v668, %v720
  %v722 = vmul.f32 %v671, %v720
  %v723 = vmul.f32 %v674, %v720
  %v724 = vmul.f32 %v677, %v720
  %v725 = vmul.f32 %v680, %v720
  %v726 = vmul.f32 %v683, %v720
  %v727 = vmul.f32 %v686, %v720
  %v728 = vmul.f32 %v689, %v720
  %v729 = vmul.f32 %v692, %v720
  %v730 = vmul.f32 %v695, %v720
  %v731 = vmul.f32 %v698, %v720
  %v732 = vmul.f32 %v701, %v720
  %v733 = vmul.f32 %v704, %v720
  %v734 = vmul.f32 %v707, %v720
  %v735 = vmul.f32 %v710, %v720
  %v736 = vmul.f32 %v713, %v720
  %v737 = vadd.f32 %v721, 0.0078125
  %v738 = vadd.f32 %v722, 0.0078125
  %v739 = vadd.f32 %v723, 0.0078125
  %v740 = vadd.f32 %v724, 0.0078125
  %v741 = vadd.f32 %v725, 0.0078125
  %v742 = vadd.f32 %v726, 0.0078125
  %v743 = vadd.f32 %v727, 0.0078125
  %v744 = vadd.f32 %v728, 0.0078125
  %v745 = vadd.f32 %v729, 0.0078125
  %v746 = vadd.f32 %v730, 0.0078125
  %v747 = vadd.f32 %v731, 0.0078125
  %v748 = vadd.f32 %v732, 0.0078125
  %v749 = vadd.f32 %v733, 0.0078125
  %v750 = vadd.f32 %v734, 0.0078125
  %v751 = vadd.f32 %v735, 0.0078125
  %v752 = vadd.f32 %v736, 0.0078125
  %v753 = vrsqrt.pop %v737
  %v754 = vmul.f32 %v753, %v737
  %v755 = vmul.f32 %v754, %v753
  %v756 = vmul.f32 0.5, %v755
  %v757 = vsub.f32 1.5, %v756
  %v758 = vmul.f32 %v753, %v757
  %vm759 = vweird.f32 %v737
  %vm760 = vweird.f32 %v753
  %vm761 = vmor %vm759, %vm760
  %v762 = vsel %vm761, %v753, %v758
  %v763 = vrsqrt.pop %v738
  %v764 = vmul.f32 %v763, %v738
  %v765 = vmul.f32 %v764, %v763
  %v766 = vmul.f32 0.5, %v765
  %v767 = vsub.f32 1.5, %v766
  %v768 = vmul.f32 %v763, %v767
  %vm769 = vweird.f32 %v738
  %vm770 = vweird.f32 %v763
  %vm771 = vmor %vm769, %vm770
  %v772 = vsel %vm771, %v763, %v768
  %v773 = vrsqrt.pop %v739
  %v774 = vmul.f32 %v773, %v739
  %v775 = vmul.f32 %v774, %v773
  %v776 = vmul.f32 0.5, %v775
  %v777 = vsub.f32 1.5, %v776
  %v778 = vmul.f32 %v773, %v777
  %vm779 = vweird.f32 %v739
  %vm780 = vweird.f32 %v773
  %vm781 = vmor %vm779, %vm780
  %v782 = vsel %vm781, %v773, %v778
  %v783 = vrsqrt.pop %v740
  %v784 = vmul.f32 %v783, %v740
  %v785 = vmul.f32 %v784, %v783
  %v786 = vmul.f32 0.5, %v785
  %v787 = vsub.f32 1.5, %v786
  %v788 = vmul.f32 %v783, %v787
  %vm789 = vweird.f32 %v740
  %vm790 = vweird.f32 %v783
  %vm791 = vmor %vm789, %vm790
  %v792 = vsel %vm791, %v783, %v788
  %v793 = vrsqrt.pop %v741
  %v794 = vmul.f32 %v793, %v741
  %v795 = vmul.f32 %v794, %v793
  %v796 = vmul.f32 0.5, %v795
  %v797 = vsub.f32 1.5, %v796
  %v798 = vmul.f32 %v793, %v797
  %vm799 = vweird.f32 %v741
  %vm800 = vweird.f32 %v793
  %vm801 = vmor %vm799, %vm800
  %v802 = vsel %vm801, %v793, %v798
  %v803 = vrsqrt.pop %v742
  %v804 = vmul.f32 %v803, %v742
  %v805 = vmul.f32 %v804, %v803
  %v806 = vmul.f32 0.5, %v805
  %v807 = vsub.f32 1.5, %v806
  %v808 = vmul.f32 %v803, %v807
  %vm809 = vweird.f32 %v742
  %vm810 = vweird.f32 %v803
  %vm811 = vmor %vm809, %vm810
  %v812 = vsel %vm811, %v803, %v808
  %v813 = vrsqrt.pop %v743
  %v814 = vmul.f32 %v813, %v743
  %v815 = vmul.f32 %v814, %v813
  %v816 = vmul.f32 0.5, %v815
  %v817 = vsub.f32 1.5, %v816
  %v818 = vmul.f32 %v813, %v817
  %vm819 = vweird.f32 %v743
  %vm820 = vweird.f32 %v813
  %vm821 = vmor %vm819, %vm820
  %v822 = vsel %vm821, %v813, %v818
  %v823 = vrsqrt.pop %v744
  %v824 = vmul.f32 %v823, %v744
  %v825 = vmul.f32 %v824, %v823
  %v826 = vmul.f32 0.5, %v825
  %v827 = vsub.f32 1.5, %v826
  %v828 = vmul.f32 %v823, %v827
  %vm829 = vweird.f32 %v744
  %vm830 = vweird.f32 %v823
  %vm831 = vmor %vm829, %vm830
  %v832 = vsel %vm831, %v823, %v828
  %v833 = vrsqrt.pop %v745
  %v834 = vmul.f32 %v833, %v745
  %v835 = vmul.f32 %v834, %v833
  %v836 = vmul.f32 0.5, %v835
  %v837 = vsub.f32 1.5, %v836
  %v838 = vmul.f32 %v833, %v837
  %vm839 = vweird.f32 %v745
  %vm840 = vweird.f32 %v833
  %vm841 = vmor %vm839, %vm840
  %v842 = vsel %vm841, %v833, %v838
  %v843 = vrsqrt.pop %v746
  %v844 = vmul.f32 %v843, %v746
  %v845 = vmul.f32 %v844, %v843
  %v846 = vmul.f32 0.5, %v845
  %v847 = vsub.f32 1.5, %v846
  %v848 = vmul.f32 %v843, %v847
  %vm849 = vweird.f32 %v746
  %vm850 = vweird.f32 %v843
  %vm851 = vmor %vm849, %vm850
  %v852 = vsel %vm851, %v843, %v848
  %v853 = vrsqrt.pop %v747
  %v854 = vmul.f32 %v853, %v747
  %v855 = vmul.f32 %v854, %v853
  %v856 = vmul.f32 0.5, %v855
  %v857 = vsub.f32 1.5, %v856
  %v858 = vmul.f32 %v853, %v857
  %vm859 = vweird.f32 %v747
  %vm860 = vweird.f32 %v853
  %vm861 = vmor %vm859, %vm860
  %v862 = vsel %vm861, %v853, %v858
  %v863 = vrsqrt.pop %v748
  %v864 = vmul.f32 %v863, %v748
  %v865 = vmul.f32 %v864, %v863
  %v866 = vmul.f32 0.5, %v865
  %v867 = vsub.f32 1.5, %v866
  %v868 = vmul.f32 %v863, %v867
  %vm869 = vweird.f32 %v748
  %vm870 = vweird.f32 %v863
  %vm871 = vmor %vm869, %vm870
  %v872 = vsel %vm871, %v863, %v868
  %v873 = vrsqrt.pop %v749
  %v874 = vmul.f32 %v873, %v749
  %v875 = vmul.f32 %v874, %v873
  %v876 = vmul.f32 0.5, %v875
  %v877 = vsub.f32 1.5, %v876
  %v878 = vmul.f32 %v873, %v877
  %vm879 = vweird.f32 %v749
  %vm880 = vweird.f32 %v873
  %vm881 = vmor %vm879, %vm880
  %v882 = vsel %vm881, %v873, %v878
  %v883 = vrsqrt.pop %v750
  %v884 = vmul.f32 %v883, %v750
  %v885 = vmul.f32 %v884, %v883
  %v886 = vmul.f32 0.5, %v885
  %v887 = vsub.f32 1.5, %v886
  %v888 = vmul.f32 %v883, %v887
  %vm889 = vweird.f32 %v750
  %vm890 = vweird.f32 %v883
  %vm891 = vmor %vm889, %vm890
  %v892 = vsel %vm891, %v883, %v888
  %v893 = vrsqrt.pop %v751
  %v894 = vmul.f32 %v893, %v751
  %v895 = vmul.f32 %v894, %v893
  %v896 = vmul.f32 0.5, %v895
  %v897 = vsub.f32 1.5, %v896
  %v898 = vmul.f32 %v893, %v897
  %vm899 = vweird.f32 %v751
  %vm900 = vweird.f32 %v893
  %vm901 = vmor %vm899, %vm900
  %v902 = vsel %vm901, %v893, %v898
  %v903 = vrsqrt.pop %v752
  %v904 = vmul.f32 %v903, %v752
  %v905 = vmul.f32 %v904, %v903
  %v906 = vmul.f32 0.5, %v905
  %v907 = vsub.f32 1.5, %v906
  %v908 = vmul.f32 %v903, %v907
  %vm909 = vweird.f32 %v752
  %vm910 = vweird.f32 %v903
  %vm911 = vmor %vm909, %vm910
  %v912 = vsel %vm911, %v903, %v908
  %v913 = vmul.f32 %v634, %v762
  %v914 = vmul.f32 %v635, %v772
  %v915 = vmul.f32 %v636, %v782
  %v916 = vmul.f32 %v637, %v792
  %v917 = vmul.f32 %v638, %v802
  %v918 = vmul.f32 %v639, %v812
  %v919 = vmul.f32 %v640, %v822
  %v920 = vmul.f32 %v641, %v832
  %v921 = vmul.f32 %v642, %v842
  %v922 = vmul.f32 %v643, %v852
  %v923 = vmul.f32 %v644, %v862
  %v924 = vmul.f32 %v645, %v872
  %v925 = vmul.f32 %v646, %v882
  %v926 = vmul.f32 %v647, %v892
  %v927 = vmul.f32 %v648, %v902
  %v928 = vmul.f32 %v649, %v912
  %v929 = vperm.slane %v525, 0
  %v930 = vmul.f32 %v913, %v929
  %v931 = vmul.f32 %v914, %v929
  %v932 = vmul.f32 %v915, %v929
  %v933 = vmul.f32 %v916, %v929
  %v934 = vmul.f32 %v917, %v929
  %v935 = vmul.f32 %v918, %v929
  %v936 = vmul.f32 %v919, %v929
  %v937 = vmul.f32 %v920, %v929
  %v938 = vmul.f32 %v921, %v929
  %v939 = vmul.f32 %v922, %v929
  %v940 = vmul.f32 %v923, %v929
  %v941 = vmul.f32 %v924, %v929
  %v942 = vmul.f32 %v925, %v929
  %v943 = vmul.f32 %v926, %v929
  %v944 = vmul.f32 %v927, %v929
  %v945 = vmul.f32 %v928, %v929
  %v946 = vadd.f32 %v33, %v930
  %v947 = vadd.f32 %v34, %v931
  %v948 = vadd.f32 %v35, %v932
  %v949 = vadd.f32 %v36, %v933
  %v950 = vadd.f32 %v37, %v934
  %v951 = vadd.f32 %v38, %v935
  %v952 = vadd.f32 %v39, %v936
  %v953 = vadd.f32 %v40, %v937
  %v954 = vadd.f32 %v41, %v938
  %v955 = vadd.f32 %v42, %v939
  %v956 = vadd.f32 %v43, %v940
  %v957 = vadd.f32 %v44, %v941
  %v958 = vadd.f32 %v45, %v942
  %v959 = vadd.f32 %v46, %v943
  %v960 = vadd.f32 %v47, %v944
  %v961 = vadd.f32 %v48, %v945
  %v962 = vld [vmem:[%s5] sm:$0xff]
  %v963 = vld [vmem:[%s5 + $0x8] sm:$0xff]
  %v964 = vld [vmem:[%s5 + $0x10] sm:$0xff]
  %v965 = vld [vmem:[%s5 + $0x18] sm:$0xff]
  %v966 = vld [vmem:[%s5 + $0x20] sm:$0xff]
  %v967 = vld [vmem:[%s5 + $0x28] sm:$0xff]
  %v968 = vld [vmem:[%s5 + $0x30] sm:$0xff]
  %v969 = vld [vmem:[%s5 + $0x38] sm:$0xff]
  %v970 = vld [vmem:[%s5 + $0x40] sm:$0xff]
  %v971 = vld [vmem:[%s5 + $0x48] sm:$0xff]
  %v972 = vld [vmem:[%s5 + $0x50] sm:$0xff]
  %v973 = vld [vmem:[%s5 + $0x58] sm:$0xff]
  %v974 = vld [vmem:[%s5 + $0x60] sm:$0xff]
  %v975 = vld [vmem:[%s5 + $0x68] sm:$0xff]
  %v976 = vld [vmem:[%s5 + $0x70] sm:$0xff]
  %v977 = vld [vmem:[%s5 + $0x78] sm:$0xff]
  %v978 = vld [vmem:[%s5 + $0x80] sm:$0xff]
  %v979 = vld [vmem:[%s5 + $0x88] sm:$0xff]
  %v980 = vld [vmem:[%s5 + $0x90] sm:$0xff]
  %v981 = vld [vmem:[%s5 + $0x98] sm:$0xff]
  %v982 = vld [vmem:[%s5 + $0xa0] sm:$0xff]
  %v983 = vld [vmem:[%s5 + $0xa8] sm:$0xff]
  %v984 = vld [vmem:[%s5 + $0xb0] sm:$0xff]
  %v985 = vld [vmem:[%s5 + $0xb8] sm:$0xff]
  %v986 = vld [vmem:[%s5 + $0xc0] sm:$0xff]
  %v987 = vld [vmem:[%s5 + $0xc8] sm:$0xff]
  %v988 = vld [vmem:[%s5 + $0xd0] sm:$0xff]
  %v989 = vld [vmem:[%s5 + $0xd8] sm:$0xff]
  %v990 = vld [vmem:[%s5 + $0xe0] sm:$0xff]
  %v991 = vld [vmem:[%s5 + $0xe8] sm:$0xff]
  %v992 = vld [vmem:[%s5 + $0xf0] sm:$0xff]
  %v993 = vld [vmem:[%s5 + $0xf8] sm:$0xff]
  %v994 = vld [vmem:[%s6] sm:$0xf]
  %v996 = vperm.slane %v994, 0
  %v997 = vperm.slane %v994, 1
  %v998 = vperm.slane %v994, 2
  %v999 = vperm.slane %v994, 3
  %v1005 = vsel %vm93, %v946, 0
  %v1008 = vsel %vm93, %v947, 0
  %v1011 = vsel %vm93, %v948, 0
  %v1014 = vsel %vm93, %v949, 0
  %v1017 = vsel %vm93, %v950, 0
  %v1020 = vsel %vm93, %v951, 0
  %v1023 = vsel %vm93, %v952, 0
  %v1026 = vsel %vm93, %v953, 0
  %v1029 = vsel %vm93, %v954, 0
  %v1032 = vsel %vm93, %v955, 0
  %v1035 = vsel %vm93, %v956, 0
  %v1038 = vsel %vm93, %v957, 0
  %v1041 = vsel %vm93, %v958, 0
  %v1044 = vsel %vm93, %v959, 0
  %v1047 = vsel %vm93, %v960, 0
  %v1050 = vsel %vm93, %v961, 0
  %1052 = vmatpush.msra.mxu0 0.0
  %1053 = vmatpush.msra.mxu0 0.0
  %1054 = vmatpush.msra.mxu0 0.0
  %1055 = vmatpush.msra.mxu0 0.0
  %1056 = vmatpush.msra.mxu0 0.0
  %1057 = vmatpush.msra.mxu0 0.0
  %1058 = vmatpush.msra.mxu0 0.0
  %1059 = vmatpush.msra.mxu0 0.0
  %1060 = vmatpush.msra.mxu0 %v990
  %1061 = vmatpush.msra.mxu0 %v986
  %1062 = vmatpush.msra.mxu0 %v982
  %1063 = vmatpush.msra.mxu0 %v978
  %1064 = vmatpush.msra.mxu0 %v974
  %1065 = vmatpush.msra.mxu0 %v970
  %1066 = vmatpush.msra.mxu0 %v966
  %1067 = vmatpush.msra.mxu0 %v962
  %1068 = vmatmul.f32.gmra.mxu0 %v1005
  %v1069 = vpop.f32.mrf.mxu0
  %v1070 = vadd.f32 %v996, %v1069
  %1071 = vmatmul.f32.gmra.mxu0 %v1008
  %v1072 = vpop.f32.mrf.mxu0
  %v1073 = vadd.f32 %v996, %v1072
  %1074 = vmatmul.f32.gmra.mxu0 %v1011
  %v1075 = vpop.f32.mrf.mxu0
  %v1076 = vadd.f32 %v996, %v1075
  %1077 = vmatmul.f32.gmra.mxu0 %v1014
  %v1078 = vpop.f32.mrf.mxu0
  %v1079 = vadd.f32 %v996, %v1078
  %1080 = vmatmul.f32.gmra.mxu0 %v1017
  %v1081 = vpop.f32.mrf.mxu0
  %v1082 = vadd.f32 %v996, %v1081
  %1083 = vmatmul.f32.gmra.mxu0 %v1020
  %v1084 = vpop.f32.mrf.mxu0
  %v1085 = vadd.f32 %v996, %v1084
  %1086 = vmatmul.f32.gmra.mxu0 %v1023
  %v1087 = vpop.f32.mrf.mxu0
  %v1088 = vadd.f32 %v996, %v1087
  %1089 = vmatmul.f32.gmra.mxu0 %v1026
  %v1090 = vpop.f32.mrf.mxu0
  %v1091 = vadd.f32 %v996, %v1090
  %1092 = vmatmul.f32.gmra.mxu0 %v1029
  %v1093 = vpop.f32.mrf.mxu0
  %v1094 = vadd.f32 %v996, %v1093
  %1095 = vmatmul.f32.gmra.mxu0 %v1032
  %v1096 = vpop.f32.mrf.mxu0
  %v1097 = vadd.f32 %v996, %v1096
  %1098 = vmatmul.f32.gmra.mxu0 %v1035
  %v1099 = vpop.f32.mrf.mxu0
  %v1100 = vadd.f32 %v996, %v1099
  %1101 = vmatmul.f32.gmra.mxu0 %v1038
  %v1102 = vpop.f32.mrf.mxu0
  %v1103 = vadd.f32 %v996, %v1102
  %1104 = vmatmul.f32.gmra.mxu0 %v1041
  %v1105 = vpop.f32.mrf.mxu0
  %v1106 = vadd.f32 %v996, %v1105
  %1107 = vmatmul.f32.gmra.mxu0 %v1044
  %v1108 = vpop.f32.mrf.mxu0
  %v1109 = vadd.f32 %v996, %v1108
  %1110 = vmatmul.f32.gmra.mxu0 %v1047
  %v1111 = vpop.f32.mrf.mxu0
  %v1112 = vadd.f32 %v996, %v1111
  %1113 = vmatmul.f32.gmra.mxu0 %v1050
  %v1114 = vpop.f32.mrf.mxu0
  %v1115 = vadd.f32 %v996, %v1114
  %1116 = vdwg.mxu0
  %1117 = vmatpush.msra.mxu0 0.0
  %1118 = vmatpush.msra.mxu0 0.0
  %1119 = vmatpush.msra.mxu0 0.0
  %1120 = vmatpush.msra.mxu0 0.0
  %1121 = vmatpush.msra.mxu0 0.0
  %1122 = vmatpush.msra.mxu0 0.0
  %1123 = vmatpush.msra.mxu0 0.0
  %1124 = vmatpush.msra.mxu0 0.0
  %1125 = vmatpush.msra.mxu0 %v991
  %1126 = vmatpush.msra.mxu0 %v987
  %1127 = vmatpush.msra.mxu0 %v983
  %1128 = vmatpush.msra.mxu0 %v979
  %1129 = vmatpush.msra.mxu0 %v975
  %1130 = vmatpush.msra.mxu0 %v971
  %1131 = vmatpush.msra.mxu0 %v967
  %1132 = vmatpush.msra.mxu0 %v963
  %1133 = vmatmul.f32.gmra.mxu0 %v1005
  %v1134 = vpop.f32.mrf.mxu0
  %v1135 = vadd.f32 %v997, %v1134
  %1136 = vmatmul.f32.gmra.mxu0 %v1008
  %v1137 = vpop.f32.mrf.mxu0
  %v1138 = vadd.f32 %v997, %v1137
  %1139 = vmatmul.f32.gmra.mxu0 %v1011
  %v1140 = vpop.f32.mrf.mxu0
  %v1141 = vadd.f32 %v997, %v1140
  %1142 = vmatmul.f32.gmra.mxu0 %v1014
  %v1143 = vpop.f32.mrf.mxu0
  %v1144 = vadd.f32 %v997, %v1143
  %1145 = vmatmul.f32.gmra.mxu0 %v1017
  %v1146 = vpop.f32.mrf.mxu0
  %v1147 = vadd.f32 %v997, %v1146
  %1148 = vmatmul.f32.gmra.mxu0 %v1020
  %v1149 = vpop.f32.mrf.mxu0
  %v1150 = vadd.f32 %v997, %v1149
  %1151 = vmatmul.f32.gmra.mxu0 %v1023
  %v1152 = vpop.f32.mrf.mxu0
  %v1153 = vadd.f32 %v997, %v1152
  %1154 = vmatmul.f32.gmra.mxu0 %v1026
  %v1155 = vpop.f32.mrf.mxu0
  %v1156 = vadd.f32 %v997, %v1155
  %1157 = vmatmul.f32.gmra.mxu0 %v1029
  %v1158 = vpop.f32.mrf.mxu0
  %v1159 = vadd.f32 %v997, %v1158
  %1160 = vmatmul.f32.gmra.mxu0 %v1032
  %v1161 = vpop.f32.mrf.mxu0
  %v1162 = vadd.f32 %v997, %v1161
  %1163 = vmatmul.f32.gmra.mxu0 %v1035
  %v1164 = vpop.f32.mrf.mxu0
  %v1165 = vadd.f32 %v997, %v1164
  %1166 = vmatmul.f32.gmra.mxu0 %v1038
  %v1167 = vpop.f32.mrf.mxu0
  %v1168 = vadd.f32 %v997, %v1167
  %1169 = vmatmul.f32.gmra.mxu0 %v1041
  %v1170 = vpop.f32.mrf.mxu0
  %v1171 = vadd.f32 %v997, %v1170
  %1172 = vmatmul.f32.gmra.mxu0 %v1044
  %v1173 = vpop.f32.mrf.mxu0
  %v1174 = vadd.f32 %v997, %v1173
  %1175 = vmatmul.f32.gmra.mxu0 %v1047
  %v1176 = vpop.f32.mrf.mxu0
  %v1177 = vadd.f32 %v997, %v1176
  %1178 = vmatmul.f32.gmra.mxu0 %v1050
  %v1179 = vpop.f32.mrf.mxu0
  %v1180 = vadd.f32 %v997, %v1179
  %1181 = vdwg.mxu0
  %1182 = vmatpush.msra.mxu0 0.0
  %1183 = vmatpush.msra.mxu0 0.0
  %1184 = vmatpush.msra.mxu0 0.0
  %1185 = vmatpush.msra.mxu0 0.0
  %1186 = vmatpush.msra.mxu0 0.0
  %1187 = vmatpush.msra.mxu0 0.0
  %1188 = vmatpush.msra.mxu0 0.0
  %1189 = vmatpush.msra.mxu0 0.0
  %1190 = vmatpush.msra.mxu0 %v992
  %1191 = vmatpush.msra.mxu0 %v988
  %1192 = vmatpush.msra.mxu0 %v984
  %1193 = vmatpush.msra.mxu0 %v980
  %1194 = vmatpush.msra.mxu0 %v976
  %1195 = vmatpush.msra.mxu0 %v972
  %1196 = vmatpush.msra.mxu0 %v968
  %1197 = vmatpush.msra.mxu0 %v964
  %1198 = vmatmul.f32.gmra.mxu0 %v1005
  %v1199 = vpop.f32.mrf.mxu0
  %v1200 = vadd.f32 %v998, %v1199
  %1201 = vmatmul.f32.gmra.mxu0 %v1008
  %v1202 = vpop.f32.mrf.mxu0
  %v1203 = vadd.f32 %v998, %v1202
  %1204 = vmatmul.f32.gmra.mxu0 %v1011
  %v1205 = vpop.f32.mrf.mxu0
  %v1206 = vadd.f32 %v998, %v1205
  %1207 = vmatmul.f32.gmra.mxu0 %v1014
  %v1208 = vpop.f32.mrf.mxu0
  %v1209 = vadd.f32 %v998, %v1208
  %1210 = vmatmul.f32.gmra.mxu0 %v1017
  %v1211 = vpop.f32.mrf.mxu0
  %v1212 = vadd.f32 %v998, %v1211
  %1213 = vmatmul.f32.gmra.mxu0 %v1020
  %v1214 = vpop.f32.mrf.mxu0
  %v1215 = vadd.f32 %v998, %v1214
  %1216 = vmatmul.f32.gmra.mxu0 %v1023
  %v1217 = vpop.f32.mrf.mxu0
  %v1218 = vadd.f32 %v998, %v1217
  %1219 = vmatmul.f32.gmra.mxu0 %v1026
  %v1220 = vpop.f32.mrf.mxu0
  %v1221 = vadd.f32 %v998, %v1220
  %1222 = vmatmul.f32.gmra.mxu0 %v1029
  %v1223 = vpop.f32.mrf.mxu0
  %v1224 = vadd.f32 %v998, %v1223
  %1225 = vmatmul.f32.gmra.mxu0 %v1032
  %v1226 = vpop.f32.mrf.mxu0
  %v1227 = vadd.f32 %v998, %v1226
  %1228 = vmatmul.f32.gmra.mxu0 %v1035
  %v1229 = vpop.f32.mrf.mxu0
  %v1230 = vadd.f32 %v998, %v1229
  %1231 = vmatmul.f32.gmra.mxu0 %v1038
  %v1232 = vpop.f32.mrf.mxu0
  %v1233 = vadd.f32 %v998, %v1232
  %1234 = vmatmul.f32.gmra.mxu0 %v1041
  %v1235 = vpop.f32.mrf.mxu0
  %v1236 = vadd.f32 %v998, %v1235
  %1237 = vmatmul.f32.gmra.mxu0 %v1044
  %v1238 = vpop.f32.mrf.mxu0
  %v1239 = vadd.f32 %v998, %v1238
  %1240 = vmatmul.f32.gmra.mxu0 %v1047
  %v1241 = vpop.f32.mrf.mxu0
  %v1242 = vadd.f32 %v998, %v1241
  %1243 = vmatmul.f32.gmra.mxu0 %v1050
  %v1244 = vpop.f32.mrf.mxu0
  %v1245 = vadd.f32 %v998, %v1244
  %1246 = vdwg.mxu0
  %1247 = vmatpush.msra.mxu0 0.0
  %1248 = vmatpush.msra.mxu0 0.0
  %1249 = vmatpush.msra.mxu0 0.0
  %1250 = vmatpush.msra.mxu0 0.0
  %1251 = vmatpush.msra.mxu0 0.0
  %1252 = vmatpush.msra.mxu0 0.0
  %1253 = vmatpush.msra.mxu0 0.0
  %1254 = vmatpush.msra.mxu0 0.0
  %1255 = vmatpush.msra.mxu0 %v993
  %1256 = vmatpush.msra.mxu0 %v989
  %1257 = vmatpush.msra.mxu0 %v985
  %1258 = vmatpush.msra.mxu0 %v981
  %1259 = vmatpush.msra.mxu0 %v977
  %1260 = vmatpush.msra.mxu0 %v973
  %1261 = vmatpush.msra.mxu0 %v969
  %1262 = vmatpush.msra.mxu0 %v965
  %1263 = vmatmul.f32.gmra.mxu0 %v1005
  %v1264 = vpop.f32.mrf.mxu0
  %v1265 = vadd.f32 %v999, %v1264
  %1266 = vmatmul.f32.gmra.mxu0 %v1008
  %v1267 = vpop.f32.mrf.mxu0
  %v1268 = vadd.f32 %v999, %v1267
  %1269 = vmatmul.f32.gmra.mxu0 %v1011
  %v1270 = vpop.f32.mrf.mxu0
  %v1271 = vadd.f32 %v999, %v1270
  %1272 = vmatmul.f32.gmra.mxu0 %v1014
  %v1273 = vpop.f32.mrf.mxu0
  %v1274 = vadd.f32 %v999, %v1273
  %1275 = vmatmul.f32.gmra.mxu0 %v1017
  %v1276 = vpop.f32.mrf.mxu0
  %v1277 = vadd.f32 %v999, %v1276
  %1278 = vmatmul.f32.gmra.mxu0 %v1020
  %v1279 = vpop.f32.mrf.mxu0
  %v1280 = vadd.f32 %v999, %v1279
  %1281 = vmatmul.f32.gmra.mxu0 %v1023
  %v1282 = vpop.f32.mrf.mxu0
  %v1283 = vadd.f32 %v999, %v1282
  %1284 = vmatmul.f32.gmra.mxu0 %v1026
  %v1285 = vpop.f32.mrf.mxu0
  %v1286 = vadd.f32 %v999, %v1285
  %1287 = vmatmul.f32.gmra.mxu0 %v1029
  %v1288 = vpop.f32.mrf.mxu0
  %v1289 = vadd.f32 %v999, %v1288
  %1290 = vmatmul.f32.gmra.mxu0 %v1032
  %v1291 = vpop.f32.mrf.mxu0
  %v1292 = vadd.f32 %v999, %v1291
  %1293 = vmatmul.f32.gmra.mxu0 %v1035
  %v1294 = vpop.f32.mrf.mxu0
  %v1295 = vadd.f32 %v999, %v1294
  %1296 = vmatmul.f32.gmra.mxu0 %v1038
  %v1297 = vpop.f32.mrf.mxu0
  %v1298 = vadd.f32 %v999, %v1297
  %1299 = vmatmul.f32.gmra.mxu0 %v1041
  %v1300 = vpop.f32.mrf.mxu0
  %v1301 = vadd.f32 %v999, %v1300
  %1302 = vmatmul.f32.gmra.mxu0 %v1044
  %v1303 = vpop.f32.mrf.mxu0
  %v1304 = vadd.f32 %v999, %v1303
  %1305 = vmatmul.f32.gmra.mxu0 %v1047
  %v1306 = vpop.f32.mrf.mxu0
  %v1307 = vadd.f32 %v999, %v1306
  %1308 = vmatmul.f32.gmra.mxu0 %v1050
  %v1309 = vpop.f32.mrf.mxu0
  %v1310 = vadd.f32 %v999, %v1309
  %1311 = vdwg.mxu0
  %v1312 = vxor.u32 %v1070, 2147483648
  %v1313 = vxor.u32 %v1135, 2147483648
  %v1314 = vxor.u32 %v1073, 2147483648
  %v1315 = vxor.u32 %v1138, 2147483648
  %v1316 = vxor.u32 %v1076, 2147483648
  %v1317 = vxor.u32 %v1141, 2147483648
  %v1318 = vxor.u32 %v1079, 2147483648
  %v1319 = vxor.u32 %v1144, 2147483648
  %v1320 = vxor.u32 %v1082, 2147483648
  %v1321 = vxor.u32 %v1147, 2147483648
  %v1322 = vxor.u32 %v1085, 2147483648
  %v1323 = vxor.u32 %v1150, 2147483648
  %v1324 = vxor.u32 %v1088, 2147483648
  %v1325 = vxor.u32 %v1153, 2147483648
  %v1326 = vxor.u32 %v1091, 2147483648
  %v1327 = vxor.u32 %v1156, 2147483648
  %v1328 = vxor.u32 %v1094, 2147483648
  %v1329 = vxor.u32 %v1159, 2147483648
  %v1330 = vxor.u32 %v1097, 2147483648
  %v1331 = vxor.u32 %v1162, 2147483648
  %v1332 = vxor.u32 %v1100, 2147483648
  %v1333 = vxor.u32 %v1165, 2147483648
  %v1334 = vxor.u32 %v1103, 2147483648
  %v1335 = vxor.u32 %v1168, 2147483648
  %v1336 = vxor.u32 %v1106, 2147483648
  %v1337 = vxor.u32 %v1171, 2147483648
  %v1338 = vxor.u32 %v1109, 2147483648
  %v1339 = vxor.u32 %v1174, 2147483648
  %v1340 = vxor.u32 %v1112, 2147483648
  %v1341 = vxor.u32 %v1177, 2147483648
  %v1342 = vxor.u32 %v1115, 2147483648
  %v1343 = vxor.u32 %v1180, 2147483648
  %v1344 = vmul.f32 %v1312, 1.442695
  %v1345 = vpow.pop %v1344
  %v1346 = vmul.f32 %v1313, 1.442695
  %v1347 = vpow.pop %v1346
  %v1348 = vmul.f32 %v1314, 1.442695
  %v1349 = vpow.pop %v1348
  %v1350 = vmul.f32 %v1315, 1.442695
  %v1351 = vpow.pop %v1350
  %v1352 = vmul.f32 %v1316, 1.442695
  %v1353 = vpow.pop %v1352
  %v1354 = vmul.f32 %v1317, 1.442695
  %v1355 = vpow.pop %v1354
  %v1356 = vmul.f32 %v1318, 1.442695
  %v1357 = vpow.pop %v1356
  %v1358 = vmul.f32 %v1319, 1.442695
  %v1359 = vpow.pop %v1358
  %v1360 = vmul.f32 %v1320, 1.442695
  %v1361 = vpow.pop %v1360
  %v1362 = vmul.f32 %v1321, 1.442695
  %v1363 = vpow.pop %v1362
  %v1364 = vmul.f32 %v1322, 1.442695
  %v1365 = vpow.pop %v1364
  %v1366 = vmul.f32 %v1323, 1.442695
  %v1367 = vpow.pop %v1366
  %v1368 = vmul.f32 %v1324, 1.442695
  %v1369 = vpow.pop %v1368
  %v1370 = vmul.f32 %v1325, 1.442695
  %v1371 = vpow.pop %v1370
  %v1372 = vmul.f32 %v1326, 1.442695
  %v1373 = vpow.pop %v1372
  %v1374 = vmul.f32 %v1327, 1.442695
  %v1375 = vpow.pop %v1374
  %v1376 = vmul.f32 %v1328, 1.442695
  %v1377 = vpow.pop %v1376
  %v1378 = vmul.f32 %v1329, 1.442695
  %v1379 = vpow.pop %v1378
  %v1380 = vmul.f32 %v1330, 1.442695
  %v1381 = vpow.pop %v1380
  %v1382 = vmul.f32 %v1331, 1.442695
  %v1383 = vpow.pop %v1382
  %v1384 = vmul.f32 %v1332, 1.442695
  %v1385 = vpow.pop %v1384
  %v1386 = vmul.f32 %v1333, 1.442695
  %v1387 = vpow.pop %v1386
  %v1388 = vmul.f32 %v1334, 1.442695
  %v1389 = vpow.pop %v1388
  %v1390 = vmul.f32 %v1335, 1.442695
  %v1391 = vpow.pop %v1390
  %v1392 = vmul.f32 %v1336, 1.442695
  %v1393 = vpow.pop %v1392
  %v1394 = vmul.f32 %v1337, 1.442695
  %v1395 = vpow.pop %v1394
  %v1396 = vmul.f32 %v1338, 1.442695
  %v1397 = vpow.pop %v1396
  %v1398 = vmul.f32 %v1339, 1.442695
  %v1399 = vpow.pop %v1398
  %v1400 = vmul.f32 %v1340, 1.442695
  %v1401 = vpow.pop %v1400
  %v1402 = vmul.f32 %v1341, 1.442695
  %v1403 = vpow.pop %v1402
  %v1404 = vmul.f32 %v1342, 1.442695
  %v1405 = vpow.pop %v1404
  %v1406 = vmul.f32 %v1343, 1.442695
  %v1407 = vpow.pop %v1406
  %v1408 = vadd.f32 %v1345, 1.0
  %v1409 = vadd.f32 %v1347, 1.0
  %v1410 = vadd.f32 %v1349, 1.0
  %v1411 = vadd.f32 %v1351, 1.0
  %v1412 = vadd.f32 %v1353, 1.0
  %v1413 = vadd.f32 %v1355, 1.0
  %v1414 = vadd.f32 %v1357, 1.0
  %v1415 = vadd.f32 %v1359, 1.0
  %v1416 = vadd.f32 %v1361, 1.0
  %v1417 = vadd.f32 %v1363, 1.0
  %v1418 = vadd.f32 %v1365, 1.0
  %v1419 = vadd.f32 %v1367, 1.0
  %v1420 = vadd.f32 %v1369, 1.0
  %v1421 = vadd.f32 %v1371, 1.0
  %v1422 = vadd.f32 %v1373, 1.0
  %v1423 = vadd.f32 %v1375, 1.0
  %v1424 = vadd.f32 %v1377, 1.0
  %v1425 = vadd.f32 %v1379, 1.0
  %v1426 = vadd.f32 %v1381, 1.0
  %v1427 = vadd.f32 %v1383, 1.0
  %v1428 = vadd.f32 %v1385, 1.0
  %v1429 = vadd.f32 %v1387, 1.0
  %v1430 = vadd.f32 %v1389, 1.0
  %v1431 = vadd.f32 %v1391, 1.0
  %v1432 = vadd.f32 %v1393, 1.0
  %v1433 = vadd.f32 %v1395, 1.0
  %v1434 = vadd.f32 %v1397, 1.0
  %v1435 = vadd.f32 %v1399, 1.0
  %v1436 = vadd.f32 %v1401, 1.0
  %v1437 = vadd.f32 %v1403, 1.0
  %v1438 = vadd.f32 %v1405, 1.0
  %v1439 = vadd.f32 %v1407, 1.0
  %v1440 = vrcp.pop %v1408
  %v1441 = vmul.f32 %v1408, %v1440
  %v1442 = vsub.f32 1.0, %v1441
  %v1443 = vmul.f32 %v1440, %v1442
  %v1444 = vadd.f32 %v1440, %v1443
  %vm1445 = vweird.f32 %v1408
  %vm1446 = vweird.f32 %v1440
  %vm1447 = vmor %vm1445, %vm1446
  %v1448 = vsel %vm1447, %v1440, %v1444
  %v1449 = vand.u32 2147483647, %v1408
  %vm1450 = vcmp.eq.f32.partialorder %v1449, 8.507059e+37
  %v1451 = vand.u32 %v1408, 2147483648
  %v1452 = vor.u32 1.1754944e-38, %v1451
  %v1453 = vsel %vm1450, %v1452, %v1448
  %v1454 = vmul.f32 1.0, %v1453
  %v1455 = vrcp.pop %v1409
  %v1456 = vmul.f32 %v1409, %v1455
  %v1457 = vsub.f32 1.0, %v1456
  %v1458 = vmul.f32 %v1455, %v1457
  %v1459 = vadd.f32 %v1455, %v1458
  %vm1460 = vweird.f32 %v1409
  %vm1461 = vweird.f32 %v1455
  %vm1462 = vmor %vm1460, %vm1461
  %v1463 = vsel %vm1462, %v1455, %v1459
  %v1464 = vand.u32 2147483647, %v1409
  %vm1465 = vcmp.eq.f32.partialorder %v1464, 8.507059e+37
  %v1466 = vand.u32 %v1409, 2147483648
  %v1467 = vor.u32 1.1754944e-38, %v1466
  %v1468 = vsel %vm1465, %v1467, %v1463
  %v1469 = vmul.f32 1.0, %v1468
  %v1470 = vrcp.pop %v1410
  %v1471 = vmul.f32 %v1410, %v1470
  %v1472 = vsub.f32 1.0, %v1471
  %v1473 = vmul.f32 %v1470, %v1472
  %v1474 = vadd.f32 %v1470, %v1473
  %vm1475 = vweird.f32 %v1410
  %vm1476 = vweird.f32 %v1470
  %vm1477 = vmor %vm1475, %vm1476
  %v1478 = vsel %vm1477, %v1470, %v1474
  %v1479 = vand.u32 2147483647, %v1410
  %vm1480 = vcmp.eq.f32.partialorder %v1479, 8.507059e+37
  %v1481 = vand.u32 %v1410, 2147483648
  %v1482 = vor.u32 1.1754944e-38, %v1481
  %v1483 = vsel %vm1480, %v1482, %v1478
  %v1484 = vmul.f32 1.0, %v1483
  %v1485 = vrcp.pop %v1411
  %v1486 = vmul.f32 %v1411, %v1485
  %v1487 = vsub.f32 1.0, %v1486
  %v1488 = vmul.f32 %v1485, %v1487
  %v1489 = vadd.f32 %v1485, %v1488
  %vm1490 = vweird.f32 %v1411
  %vm1491 = vweird.f32 %v1485
  %vm1492 = vmor %vm1490, %vm1491
  %v1493 = vsel %vm1492, %v1485, %v1489
  %v1494 = vand.u32 2147483647, %v1411
  %vm1495 = vcmp.eq.f32.partialorder %v1494, 8.507059e+37
  %v1496 = vand.u32 %v1411, 2147483648
  %v1497 = vor.u32 1.1754944e-38, %v1496
  %v1498 = vsel %vm1495, %v1497, %v1493
  %v1499 = vmul.f32 1.0, %v1498
  %v1500 = vrcp.pop %v1412
  %v1501 = vmul.f32 %v1412, %v1500
  %v1502 = vsub.f32 1.0, %v1501
  %v1503 = vmul.f32 %v1500, %v1502
  %v1504 = vadd.f32 %v1500, %v1503
  %vm1505 = vweird.f32 %v1412
  %vm1506 = vweird.f32 %v1500
  %vm1507 = vmor %vm1505, %vm1506
  %v1508 = vsel %vm1507, %v1500, %v1504
  %v1509 = vand.u32 2147483647, %v1412
  %vm1510 = vcmp.eq.f32.partialorder %v1509, 8.507059e+37
  %v1511 = vand.u32 %v1412, 2147483648
  %v1512 = vor.u32 1.1754944e-38, %v1511
  %v1513 = vsel %vm1510, %v1512, %v1508
  %v1514 = vmul.f32 1.0, %v1513
  %v1515 = vrcp.pop %v1413
  %v1516 = vmul.f32 %v1413, %v1515
  %v1517 = vsub.f32 1.0, %v1516
  %v1518 = vmul.f32 %v1515, %v1517
  %v1519 = vadd.f32 %v1515, %v1518
  %vm1520 = vweird.f32 %v1413
  %vm1521 = vweird.f32 %v1515
  %vm1522 = vmor %vm1520, %vm1521
  %v1523 = vsel %vm1522, %v1515, %v1519
  %v1524 = vand.u32 2147483647, %v1413
  %vm1525 = vcmp.eq.f32.partialorder %v1524, 8.507059e+37
  %v1526 = vand.u32 %v1413, 2147483648
  %v1527 = vor.u32 1.1754944e-38, %v1526
  %v1528 = vsel %vm1525, %v1527, %v1523
  %v1529 = vmul.f32 1.0, %v1528
  %v1530 = vrcp.pop %v1414
  %v1531 = vmul.f32 %v1414, %v1530
  %v1532 = vsub.f32 1.0, %v1531
  %v1533 = vmul.f32 %v1530, %v1532
  %v1534 = vadd.f32 %v1530, %v1533
  %vm1535 = vweird.f32 %v1414
  %vm1536 = vweird.f32 %v1530
  %vm1537 = vmor %vm1535, %vm1536
  %v1538 = vsel %vm1537, %v1530, %v1534
  %v1539 = vand.u32 2147483647, %v1414
  %vm1540 = vcmp.eq.f32.partialorder %v1539, 8.507059e+37
  %v1541 = vand.u32 %v1414, 2147483648
  %v1542 = vor.u32 1.1754944e-38, %v1541
  %v1543 = vsel %vm1540, %v1542, %v1538
  %v1544 = vmul.f32 1.0, %v1543
  %v1545 = vrcp.pop %v1415
  %v1546 = vmul.f32 %v1415, %v1545
  %v1547 = vsub.f32 1.0, %v1546
  %v1548 = vmul.f32 %v1545, %v1547
  %v1549 = vadd.f32 %v1545, %v1548
  %vm1550 = vweird.f32 %v1415
  %vm1551 = vweird.f32 %v1545
  %vm1552 = vmor %vm1550, %vm1551
  %v1553 = vsel %vm1552, %v1545, %v1549
  %v1554 = vand.u32 2147483647, %v1415
  %vm1555 = vcmp.eq.f32.partialorder %v1554, 8.507059e+37
  %v1556 = vand.u32 %v1415, 2147483648
  %v1557 = vor.u32 1.1754944e-38, %v1556
  %v1558 = vsel %vm1555, %v1557, %v1553
  %v1559 = vmul.f32 1.0, %v1558
  %v1560 = vrcp.pop %v1416
  %v1561 = vmul.f32 %v1416, %v1560
  %v1562 = vsub.f32 1.0, %v1561
  %v1563 = vmul.f32 %v1560, %v1562
  %v1564 = vadd.f32 %v1560, %v1563
  %vm1565 = vweird.f32 %v1416
  %vm1566 = vweird.f32 %v1560
  %vm1567 = vmor %vm1565, %vm1566
  %v1568 = vsel %vm1567, %v1560, %v1564
  %v1569 = vand.u32 2147483647, %v1416
  %vm1570 = vcmp.eq.f32.partialorder %v1569, 8.507059e+37
  %v1571 = vand.u32 %v1416, 2147483648
  %v1572 = vor.u32 1.1754944e-38, %v1571
  %v1573 = vsel %vm1570, %v1572, %v1568
  %v1574 = vmul.f32 1.0, %v1573
  %v1575 = vrcp.pop %v1417
  %v1576 = vmul.f32 %v1417, %v1575
  %v1577 = vsub.f32 1.0, %v1576
  %v1578 = vmul.f32 %v1575, %v1577
  %v1579 = vadd.f32 %v1575, %v1578
  %vm1580 = vweird.f32 %v1417
  %vm1581 = vweird.f32 %v1575
  %vm1582 = vmor %vm1580, %vm1581
  %v1583 = vsel %vm1582, %v1575, %v1579
  %v1584 = vand.u32 2147483647, %v1417
  %vm1585 = vcmp.eq.f32.partialorder %v1584, 8.507059e+37
  %v1586 = vand.u32 %v1417, 2147483648
  %v1587 = vor.u32 1.1754944e-38, %v1586
  %v1588 = vsel %vm1585, %v1587, %v1583
  %v1589 = vmul.f32 1.0, %v1588
  %v1590 = vrcp.pop %v1418
  %v1591 = vmul.f32 %v1418, %v1590
  %v1592 = vsub.f32 1.0, %v1591
  %v1593 = vmul.f32 %v1590, %v1592
  %v1594 = vadd.f32 %v1590, %v1593
  %vm1595 = vweird.f32 %v1418
  %vm1596 = vweird.f32 %v1590
  %vm1597 = vmor %vm1595, %vm1596
  %v1598 = vsel %vm1597, %v1590, %v1594
  %v1599 = vand.u32 2147483647, %v1418
  %vm1600 = vcmp.eq.f32.partialorder %v1599, 8.507059e+37
  %v1601 = vand.u32 %v1418, 2147483648
  %v1602 = vor.u32 1.1754944e-38, %v1601
  %v1603 = vsel %vm1600, %v1602, %v1598
  %v1604 = vmul.f32 1.0, %v1603
  %v1605 = vrcp.pop %v1419
  %v1606 = vmul.f32 %v1419, %v1605
  %v1607 = vsub.f32 1.0, %v1606
  %v1608 = vmul.f32 %v1605, %v1607
  %v1609 = vadd.f32 %v1605, %v1608
  %vm1610 = vweird.f32 %v1419
  %vm1611 = vweird.f32 %v1605
  %vm1612 = vmor %vm1610, %vm1611
  %v1613 = vsel %vm1612, %v1605, %v1609
  %v1614 = vand.u32 2147483647, %v1419
  %vm1615 = vcmp.eq.f32.partialorder %v1614, 8.507059e+37
  %v1616 = vand.u32 %v1419, 2147483648
  %v1617 = vor.u32 1.1754944e-38, %v1616
  %v1618 = vsel %vm1615, %v1617, %v1613
  %v1619 = vmul.f32 1.0, %v1618
  %v1620 = vrcp.pop %v1420
  %v1621 = vmul.f32 %v1420, %v1620
  %v1622 = vsub.f32 1.0, %v1621
  %v1623 = vmul.f32 %v1620, %v1622
  %v1624 = vadd.f32 %v1620, %v1623
  %vm1625 = vweird.f32 %v1420
  %vm1626 = vweird.f32 %v1620
  %vm1627 = vmor %vm1625, %vm1626
  %v1628 = vsel %vm1627, %v1620, %v1624
  %v1629 = vand.u32 2147483647, %v1420
  %vm1630 = vcmp.eq.f32.partialorder %v1629, 8.507059e+37
  %v1631 = vand.u32 %v1420, 2147483648
  %v1632 = vor.u32 1.1754944e-38, %v1631
  %v1633 = vsel %vm1630, %v1632, %v1628
  %v1634 = vmul.f32 1.0, %v1633
  %v1635 = vrcp.pop %v1421
  %v1636 = vmul.f32 %v1421, %v1635
  %v1637 = vsub.f32 1.0, %v1636
  %v1638 = vmul.f32 %v1635, %v1637
  %v1639 = vadd.f32 %v1635, %v1638
  %vm1640 = vweird.f32 %v1421
  %vm1641 = vweird.f32 %v1635
  %vm1642 = vmor %vm1640, %vm1641
  %v1643 = vsel %vm1642, %v1635, %v1639
  %v1644 = vand.u32 2147483647, %v1421
  %vm1645 = vcmp.eq.f32.partialorder %v1644, 8.507059e+37
  %v1646 = vand.u32 %v1421, 2147483648
  %v1647 = vor.u32 1.1754944e-38, %v1646
  %v1648 = vsel %vm1645, %v1647, %v1643
  %v1649 = vmul.f32 1.0, %v1648
  %v1650 = vrcp.pop %v1422
  %v1651 = vmul.f32 %v1422, %v1650
  %v1652 = vsub.f32 1.0, %v1651
  %v1653 = vmul.f32 %v1650, %v1652
  %v1654 = vadd.f32 %v1650, %v1653
  %vm1655 = vweird.f32 %v1422
  %vm1656 = vweird.f32 %v1650
  %vm1657 = vmor %vm1655, %vm1656
  %v1658 = vsel %vm1657, %v1650, %v1654
  %v1659 = vand.u32 2147483647, %v1422
  %vm1660 = vcmp.eq.f32.partialorder %v1659, 8.507059e+37
  %v1661 = vand.u32 %v1422, 2147483648
  %v1662 = vor.u32 1.1754944e-38, %v1661
  %v1663 = vsel %vm1660, %v1662, %v1658
  %v1664 = vmul.f32 1.0, %v1663
  %v1665 = vrcp.pop %v1423
  %v1666 = vmul.f32 %v1423, %v1665
  %v1667 = vsub.f32 1.0, %v1666
  %v1668 = vmul.f32 %v1665, %v1667
  %v1669 = vadd.f32 %v1665, %v1668
  %vm1670 = vweird.f32 %v1423
  %vm1671 = vweird.f32 %v1665
  %vm1672 = vmor %vm1670, %vm1671
  %v1673 = vsel %vm1672, %v1665, %v1669
  %v1674 = vand.u32 2147483647, %v1423
  %vm1675 = vcmp.eq.f32.partialorder %v1674, 8.507059e+37
  %v1676 = vand.u32 %v1423, 2147483648
  %v1677 = vor.u32 1.1754944e-38, %v1676
  %v1678 = vsel %vm1675, %v1677, %v1673
  %v1679 = vmul.f32 1.0, %v1678
  %v1680 = vrcp.pop %v1424
  %v1681 = vmul.f32 %v1424, %v1680
  %v1682 = vsub.f32 1.0, %v1681
  %v1683 = vmul.f32 %v1680, %v1682
  %v1684 = vadd.f32 %v1680, %v1683
  %vm1685 = vweird.f32 %v1424
  %vm1686 = vweird.f32 %v1680
  %vm1687 = vmor %vm1685, %vm1686
  %v1688 = vsel %vm1687, %v1680, %v1684
  %v1689 = vand.u32 2147483647, %v1424
  %vm1690 = vcmp.eq.f32.partialorder %v1689, 8.507059e+37
  %v1691 = vand.u32 %v1424, 2147483648
  %v1692 = vor.u32 1.1754944e-38, %v1691
  %v1693 = vsel %vm1690, %v1692, %v1688
  %v1694 = vmul.f32 1.0, %v1693
  %v1695 = vrcp.pop %v1425
  %v1696 = vmul.f32 %v1425, %v1695
  %v1697 = vsub.f32 1.0, %v1696
  %v1698 = vmul.f32 %v1695, %v1697
  %v1699 = vadd.f32 %v1695, %v1698
  %vm1700 = vweird.f32 %v1425
  %vm1701 = vweird.f32 %v1695
  %vm1702 = vmor %vm1700, %vm1701
  %v1703 = vsel %vm1702, %v1695, %v1699
  %v1704 = vand.u32 2147483647, %v1425
  %vm1705 = vcmp.eq.f32.partialorder %v1704, 8.507059e+37
  %v1706 = vand.u32 %v1425, 2147483648
  %v1707 = vor.u32 1.1754944e-38, %v1706
  %v1708 = vsel %vm1705, %v1707, %v1703
  %v1709 = vmul.f32 1.0, %v1708
  %v1710 = vrcp.pop %v1426
  %v1711 = vmul.f32 %v1426, %v1710
  %v1712 = vsub.f32 1.0, %v1711
  %v1713 = vmul.f32 %v1710, %v1712
  %v1714 = vadd.f32 %v1710, %v1713
  %vm1715 = vweird.f32 %v1426
  %vm1716 = vweird.f32 %v1710
  %vm1717 = vmor %vm1715, %vm1716
  %v1718 = vsel %vm1717, %v1710, %v1714
  %v1719 = vand.u32 2147483647, %v1426
  %vm1720 = vcmp.eq.f32.partialorder %v1719, 8.507059e+37
  %v1721 = vand.u32 %v1426, 2147483648
  %v1722 = vor.u32 1.1754944e-38, %v1721
  %v1723 = vsel %vm1720, %v1722, %v1718
  %v1724 = vmul.f32 1.0, %v1723
  %v1725 = vrcp.pop %v1427
  %v1726 = vmul.f32 %v1427, %v1725
  %v1727 = vsub.f32 1.0, %v1726
  %v1728 = vmul.f32 %v1725, %v1727
  %v1729 = vadd.f32 %v1725, %v1728
  %vm1730 = vweird.f32 %v1427
  %vm1731 = vweird.f32 %v1725
  %vm1732 = vmor %vm1730, %vm1731
  %v1733 = vsel %vm1732, %v1725, %v1729
  %v1734 = vand.u32 2147483647, %v1427
  %vm1735 = vcmp.eq.f32.partialorder %v1734, 8.507059e+37
  %v1736 = vand.u32 %v1427, 2147483648
  %v1737 = vor.u32 1.1754944e-38, %v1736
  %v1738 = vsel %vm1735, %v1737, %v1733
  %v1739 = vmul.f32 1.0, %v1738
  %v1740 = vrcp.pop %v1428
  %v1741 = vmul.f32 %v1428, %v1740
  %v1742 = vsub.f32 1.0, %v1741
  %v1743 = vmul.f32 %v1740, %v1742
  %v1744 = vadd.f32 %v1740, %v1743
  %vm1745 = vweird.f32 %v1428
  %vm1746 = vweird.f32 %v1740
  %vm1747 = vmor %vm1745, %vm1746
  %v1748 = vsel %vm1747, %v1740, %v1744
  %v1749 = vand.u32 2147483647, %v1428
  %vm1750 = vcmp.eq.f32.partialorder %v1749, 8.507059e+37
  %v1751 = vand.u32 %v1428, 2147483648
  %v1752 = vor.u32 1.1754944e-38, %v1751
  %v1753 = vsel %vm1750, %v1752, %v1748
  %v1754 = vmul.f32 1.0, %v1753
  %v1755 = vrcp.pop %v1429
  %v1756 = vmul.f32 %v1429, %v1755
  %v1757 = vsub.f32 1.0, %v1756
  %v1758 = vmul.f32 %v1755, %v1757
  %v1759 = vadd.f32 %v1755, %v1758
  %vm1760 = vweird.f32 %v1429
  %vm1761 = vweird.f32 %v1755
  %vm1762 = vmor %vm1760, %vm1761
  %v1763 = vsel %vm1762, %v1755, %v1759
  %v1764 = vand.u32 2147483647, %v1429
  %vm1765 = vcmp.eq.f32.partialorder %v1764, 8.507059e+37
  %v1766 = vand.u32 %v1429, 2147483648
  %v1767 = vor.u32 1.1754944e-38, %v1766
  %v1768 = vsel %vm1765, %v1767, %v1763
  %v1769 = vmul.f32 1.0, %v1768
  %v1770 = vrcp.pop %v1430
  %v1771 = vmul.f32 %v1430, %v1770
  %v1772 = vsub.f32 1.0, %v1771
  %v1773 = vmul.f32 %v1770, %v1772
  %v1774 = vadd.f32 %v1770, %v1773
  %vm1775 = vweird.f32 %v1430
  %vm1776 = vweird.f32 %v1770
  %vm1777 = vmor %vm1775, %vm1776
  %v1778 = vsel %vm1777, %v1770, %v1774
  %v1779 = vand.u32 2147483647, %v1430
  %vm1780 = vcmp.eq.f32.partialorder %v1779, 8.507059e+37
  %v1781 = vand.u32 %v1430, 2147483648
  %v1782 = vor.u32 1.1754944e-38, %v1781
  %v1783 = vsel %vm1780, %v1782, %v1778
  %v1784 = vmul.f32 1.0, %v1783
  %v1785 = vrcp.pop %v1431
  %v1786 = vmul.f32 %v1431, %v1785
  %v1787 = vsub.f32 1.0, %v1786
  %v1788 = vmul.f32 %v1785, %v1787
  %v1789 = vadd.f32 %v1785, %v1788
  %vm1790 = vweird.f32 %v1431
  %vm1791 = vweird.f32 %v1785
  %vm1792 = vmor %vm1790, %vm1791
  %v1793 = vsel %vm1792, %v1785, %v1789
  %v1794 = vand.u32 2147483647, %v1431
  %vm1795 = vcmp.eq.f32.partialorder %v1794, 8.507059e+37
  %v1796 = vand.u32 %v1431, 2147483648
  %v1797 = vor.u32 1.1754944e-38, %v1796
  %v1798 = vsel %vm1795, %v1797, %v1793
  %v1799 = vmul.f32 1.0, %v1798
  %v1800 = vrcp.pop %v1432
  %v1801 = vmul.f32 %v1432, %v1800
  %v1802 = vsub.f32 1.0, %v1801
  %v1803 = vmul.f32 %v1800, %v1802
  %v1804 = vadd.f32 %v1800, %v1803
  %vm1805 = vweird.f32 %v1432
  %vm1806 = vweird.f32 %v1800
  %vm1807 = vmor %vm1805, %vm1806
  %v1808 = vsel %vm1807, %v1800, %v1804
  %v1809 = vand.u32 2147483647, %v1432
  %vm1810 = vcmp.eq.f32.partialorder %v1809, 8.507059e+37
  %v1811 = vand.u32 %v1432, 2147483648
  %v1812 = vor.u32 1.1754944e-38, %v1811
  %v1813 = vsel %vm1810, %v1812, %v1808
  %v1814 = vmul.f32 1.0, %v1813
  %v1815 = vrcp.pop %v1433
  %v1816 = vmul.f32 %v1433, %v1815
  %v1817 = vsub.f32 1.0, %v1816
  %v1818 = vmul.f32 %v1815, %v1817
  %v1819 = vadd.f32 %v1815, %v1818
  %vm1820 = vweird.f32 %v1433
  %vm1821 = vweird.f32 %v1815
  %vm1822 = vmor %vm1820, %vm1821
  %v1823 = vsel %vm1822, %v1815, %v1819
  %v1824 = vand.u32 2147483647, %v1433
  %vm1825 = vcmp.eq.f32.partialorder %v1824, 8.507059e+37
  %v1826 = vand.u32 %v1433, 2147483648
  %v1827 = vor.u32 1.1754944e-38, %v1826
  %v1828 = vsel %vm1825, %v1827, %v1823
  %v1829 = vmul.f32 1.0, %v1828
  %v1830 = vrcp.pop %v1434
  %v1831 = vmul.f32 %v1434, %v1830
  %v1832 = vsub.f32 1.0, %v1831
  %v1833 = vmul.f32 %v1830, %v1832
  %v1834 = vadd.f32 %v1830, %v1833
  %vm1835 = vweird.f32 %v1434
  %vm1836 = vweird.f32 %v1830
  %vm1837 = vmor %vm1835, %vm1836
  %v1838 = vsel %vm1837, %v1830, %v1834
  %v1839 = vand.u32 2147483647, %v1434
  %vm1840 = vcmp.eq.f32.partialorder %v1839, 8.507059e+37
  %v1841 = vand.u32 %v1434, 2147483648
  %v1842 = vor.u32 1.1754944e-38, %v1841
  %v1843 = vsel %vm1840, %v1842, %v1838
  %v1844 = vmul.f32 1.0, %v1843
  %v1845 = vrcp.pop %v1435
  %v1846 = vmul.f32 %v1435, %v1845
  %v1847 = vsub.f32 1.0, %v1846
  %v1848 = vmul.f32 %v1845, %v1847
  %v1849 = vadd.f32 %v1845, %v1848
  %vm1850 = vweird.f32 %v1435
  %vm1851 = vweird.f32 %v1845
  %vm1852 = vmor %vm1850, %vm1851
  %v1853 = vsel %vm1852, %v1845, %v1849
  %v1854 = vand.u32 2147483647, %v1435
  %vm1855 = vcmp.eq.f32.partialorder %v1854, 8.507059e+37
  %v1856 = vand.u32 %v1435, 2147483648
  %v1857 = vor.u32 1.1754944e-38, %v1856
  %v1858 = vsel %vm1855, %v1857, %v1853
  %v1859 = vmul.f32 1.0, %v1858
  %v1860 = vrcp.pop %v1436
  %v1861 = vmul.f32 %v1436, %v1860
  %v1862 = vsub.f32 1.0, %v1861
  %v1863 = vmul.f32 %v1860, %v1862
  %v1864 = vadd.f32 %v1860, %v1863
  %vm1865 = vweird.f32 %v1436
  %vm1866 = vweird.f32 %v1860
  %vm1867 = vmor %vm1865, %vm1866
  %v1868 = vsel %vm1867, %v1860, %v1864
  %v1869 = vand.u32 2147483647, %v1436
  %vm1870 = vcmp.eq.f32.partialorder %v1869, 8.507059e+37
  %v1871 = vand.u32 %v1436, 2147483648
  %v1872 = vor.u32 1.1754944e-38, %v1871
  %v1873 = vsel %vm1870, %v1872, %v1868
  %v1874 = vmul.f32 1.0, %v1873
  %v1875 = vrcp.pop %v1437
  %v1876 = vmul.f32 %v1437, %v1875
  %v1877 = vsub.f32 1.0, %v1876
  %v1878 = vmul.f32 %v1875, %v1877
  %v1879 = vadd.f32 %v1875, %v1878
  %vm1880 = vweird.f32 %v1437
  %vm1881 = vweird.f32 %v1875
  %vm1882 = vmor %vm1880, %vm1881
  %v1883 = vsel %vm1882, %v1875, %v1879
  %v1884 = vand.u32 2147483647, %v1437
  %vm1885 = vcmp.eq.f32.partialorder %v1884, 8.507059e+37
  %v1886 = vand.u32 %v1437, 2147483648
  %v1887 = vor.u32 1.1754944e-38, %v1886
  %v1888 = vsel %vm1885, %v1887, %v1883
  %v1889 = vmul.f32 1.0, %v1888
  %v1890 = vrcp.pop %v1438
  %v1891 = vmul.f32 %v1438, %v1890
  %v1892 = vsub.f32 1.0, %v1891
  %v1893 = vmul.f32 %v1890, %v1892
  %v1894 = vadd.f32 %v1890, %v1893
  %vm1895 = vweird.f32 %v1438
  %vm1896 = vweird.f32 %v1890
  %vm1897 = vmor %vm1895, %vm1896
  %v1898 = vsel %vm1897, %v1890, %v1894
  %v1899 = vand.u32 2147483647, %v1438
  %vm1900 = vcmp.eq.f32.partialorder %v1899, 8.507059e+37
  %v1901 = vand.u32 %v1438, 2147483648
  %v1902 = vor.u32 1.1754944e-38, %v1901
  %v1903 = vsel %vm1900, %v1902, %v1898
  %v1904 = vmul.f32 1.0, %v1903
  %v1905 = vrcp.pop %v1439
  %v1906 = vmul.f32 %v1439, %v1905
  %v1907 = vsub.f32 1.0, %v1906
  %v1908 = vmul.f32 %v1905, %v1907
  %v1909 = vadd.f32 %v1905, %v1908
  %vm1910 = vweird.f32 %v1439
  %vm1911 = vweird.f32 %v1905
  %vm1912 = vmor %vm1910, %vm1911
  %v1913 = vsel %vm1912, %v1905, %v1909
  %v1914 = vand.u32 2147483647, %v1439
  %vm1915 = vcmp.eq.f32.partialorder %v1914, 8.507059e+37
  %v1916 = vand.u32 %v1439, 2147483648
  %v1917 = vor.u32 1.1754944e-38, %v1916
  %v1918 = vsel %vm1915, %v1917, %v1913
  %v1919 = vmul.f32 1.0, %v1918
  %v1920 = vmul.f32 %v1070, %v1454
  %v1921 = vmul.f32 %v1135, %v1469
  %v1922 = vmul.f32 %v1073, %v1484
  %v1923 = vmul.f32 %v1138, %v1499
  %v1924 = vmul.f32 %v1076, %v1514
  %v1925 = vmul.f32 %v1141, %v1529
  %v1926 = vmul.f32 %v1079, %v1544
  %v1927 = vmul.f32 %v1144, %v1559
  %v1928 = vmul.f32 %v1082, %v1574
  %v1929 = vmul.f32 %v1147, %v1589
  %v1930 = vmul.f32 %v1085, %v1604
  %v1931 = vmul.f32 %v1150, %v1619
  %v1932 = vmul.f32 %v1088, %v1634
  %v1933 = vmul.f32 %v1153, %v1649
  %v1934 = vmul.f32 %v1091, %v1664
  %v1935 = vmul.f32 %v1156, %v1679
  %v1936 = vmul.f32 %v1094, %v1694
  %v1937 = vmul.f32 %v1159, %v1709
  %v1938 = vmul.f32 %v1097, %v1724
  %v1939 = vmul.f32 %v1162, %v1739
  %v1940 = vmul.f32 %v1100, %v1754
  %v1941 = vmul.f32 %v1165, %v1769
  %v1942 = vmul.f32 %v1103, %v1784
  %v1943 = vmul.f32 %v1168, %v1799
  %v1944 = vmul.f32 %v1106, %v1814
  %v1945 = vmul.f32 %v1171, %v1829
  %v1946 = vmul.f32 %v1109, %v1844
  %v1947 = vmul.f32 %v1174, %v1859
  %v1948 = vmul.f32 %v1112, %v1874
  %v1949 = vmul.f32 %v1177, %v1889
  %v1950 = vmul.f32 %v1115, %v1904
  %v1951 = vmul.f32 %v1180, %v1919
  %v1952 = vmul.f32 %v1920, %v1200
  %v1953 = vmul.f32 %v1921, %v1265
  %v1954 = vmul.f32 %v1922, %v1203
  %v1955 = vmul.f32 %v1923, %v1268
  %v1956 = vmul.f32 %v1924, %v1206
  %v1957 = vmul.f32 %v1925, %v1271
  %v1958 = vmul.f32 %v1926, %v1209
  %v1959 = vmul.f32 %v1927, %v1274
  %v1960 = vmul.f32 %v1928, %v1212
  %v1961 = vmul.f32 %v1929, %v1277
  %v1962 = vmul.f32 %v1930, %v1215
  %v1963 = vmul.f32 %v1931, %v1280
  %v1964 = vmul.f32 %v1932, %v1218
  %v1965 = vmul.f32 %v1933, %v1283
  %v1966 = vmul.f32 %v1934, %v1221
  %v1967 = vmul.f32 %v1935, %v1286
  %v1968 = vmul.f32 %v1936, %v1224
  %v1969 = vmul.f32 %v1937, %v1289
  %v1970 = vmul.f32 %v1938, %v1227
  %v1971 = vmul.f32 %v1939, %v1292
  %v1972 = vmul.f32 %v1940, %v1230
  %v1973 = vmul.f32 %v1941, %v1295
  %v1974 = vmul.f32 %v1942, %v1233
  %v1975 = vmul.f32 %v1943, %v1298
  %v1976 = vmul.f32 %v1944, %v1236
  %v1977 = vmul.f32 %v1945, %v1301
  %v1978 = vmul.f32 %v1946, %v1239
  %v1979 = vmul.f32 %v1947, %v1304
  %v1980 = vmul.f32 %v1948, %v1242
  %v1981 = vmul.f32 %v1949, %v1307
  %v1982 = vmul.f32 %v1950, %v1245
  %v1983 = vmul.f32 %v1951, %v1310
  %v1984 = vld [vmem:[%s7] sm:$0xff]
  %v1985 = vld [vmem:[%s7 + $0x8] sm:$0xff]
  %v1986 = vld [vmem:[%s7 + $0x10] sm:$0xff]
  %v1987 = vld [vmem:[%s7 + $0x18] sm:$0xff]
  %v1988 = vld [vmem:[%s7 + $0x20] sm:$0xff]
  %v1989 = vld [vmem:[%s7 + $0x28] sm:$0xff]
  %v1990 = vld [vmem:[%s7 + $0x30] sm:$0xff]
  %v1991 = vld [vmem:[%s7 + $0x38] sm:$0xff]
  %v1992 = vld [vmem:[%s7 + $0x40] sm:$0xff]
  %v1993 = vld [vmem:[%s7 + $0x48] sm:$0xff]
  %v1994 = vld [vmem:[%s7 + $0x50] sm:$0xff]
  %v1995 = vld [vmem:[%s7 + $0x58] sm:$0xff]
  %v1996 = vld [vmem:[%s7 + $0x60] sm:$0xff]
  %v1997 = vld [vmem:[%s7 + $0x68] sm:$0xff]
  %v1998 = vld [vmem:[%s7 + $0x70] sm:$0xff]
  %v1999 = vld [vmem:[%s7 + $0x78] sm:$0xff]
  %v2000 = vld [vmem:[%s7 + $0x80] sm:$0xff]
  %v2001 = vld [vmem:[%s7 + $0x88] sm:$0xff]
  %v2002 = vld [vmem:[%s7 + $0x90] sm:$0xff]
  %v2003 = vld [vmem:[%s7 + $0x98] sm:$0xff]
  %v2004 = vld [vmem:[%s7 + $0xa0] sm:$0xff]
  %v2005 = vld [vmem:[%s7 + $0xa8] sm:$0xff]
  %v2006 = vld [vmem:[%s7 + $0xb0] sm:$0xff]
  %v2007 = vld [vmem:[%s7 + $0xb8] sm:$0xff]
  %v2008 = vld [vmem:[%s7 + $0xc0] sm:$0xff]
  %v2009 = vld [vmem:[%s7 + $0xc8] sm:$0xff]
  %v2010 = vld [vmem:[%s7 + $0xd0] sm:$0xff]
  %v2011 = vld [vmem:[%s7 + $0xd8] sm:$0xff]
  %v2012 = vld [vmem:[%s7 + $0xe0] sm:$0xff]
  %v2013 = vld [vmem:[%s7 + $0xe8] sm:$0xff]
  %v2014 = vld [vmem:[%s7 + $0xf0] sm:$0xff]
  %v2015 = vld [vmem:[%s7 + $0xf8] sm:$0xff]
  %v2016 = vperm.slane %v526, 0
  %2017 = vmatpush.msra.mxu0 %v1999
  %2018 = vmatpush.msra.mxu0 %v1998
  %2019 = vmatpush.msra.mxu0 %v1997
  %2020 = vmatpush.msra.mxu0 %v1996
  %2021 = vmatpush.msra.mxu0 %v1995
  %2022 = vmatpush.msra.mxu0 %v1994
  %2023 = vmatpush.msra.mxu0 %v1993
  %2024 = vmatpush.msra.mxu0 %v1992
  %2025 = vmatpush.msra.mxu0 %v1991
  %2026 = vmatpush.msra.mxu0 %v1990
  %2027 = vmatpush.msra.mxu0 %v1989
  %2028 = vmatpush.msra.mxu0 %v1988
  %2029 = vmatpush.msra.mxu0 %v1987
  %2030 = vmatpush.msra.mxu0 %v1986
  %2031 = vmatpush.msra.mxu0 %v1985
  %2032 = vmatpush.msra.mxu0 %v1984
  %2033 = vmatmul.f32.gmra.mxu0 %v1952
  %v2034 = vpop.f32.mrf.mxu0
  %v2035 = vadd.f32 %v2016, %v2034
  %2036 = vmatmul.f32.gmra.mxu0 %v1954
  %v2037 = vpop.f32.mrf.mxu0
  %v2038 = vadd.f32 %v2016, %v2037
  %2039 = vmatmul.f32.gmra.mxu0 %v1956
  %v2040 = vpop.f32.mrf.mxu0
  %v2041 = vadd.f32 %v2016, %v2040
  %2042 = vmatmul.f32.gmra.mxu0 %v1958
  %v2043 = vpop.f32.mrf.mxu0
  %v2044 = vadd.f32 %v2016, %v2043
  %2045 = vmatmul.f32.gmra.mxu0 %v1960
  %v2046 = vpop.f32.mrf.mxu0
  %v2047 = vadd.f32 %v2016, %v2046
  %2048 = vmatmul.f32.gmra.mxu0 %v1962
  %v2049 = vpop.f32.mrf.mxu0
  %v2050 = vadd.f32 %v2016, %v2049
  %2051 = vmatmul.f32.gmra.mxu0 %v1964
  %v2052 = vpop.f32.mrf.mxu0
  %v2053 = vadd.f32 %v2016, %v2052
  %2054 = vmatmul.f32.gmra.mxu0 %v1966
  %v2055 = vpop.f32.mrf.mxu0
  %v2056 = vadd.f32 %v2016, %v2055
  %2057 = vmatmul.f32.gmra.mxu0 %v1968
  %v2058 = vpop.f32.mrf.mxu0
  %v2059 = vadd.f32 %v2016, %v2058
  %2060 = vmatmul.f32.gmra.mxu0 %v1970
  %v2061 = vpop.f32.mrf.mxu0
  %v2062 = vadd.f32 %v2016, %v2061
  %2063 = vmatmul.f32.gmra.mxu0 %v1972
  %v2064 = vpop.f32.mrf.mxu0
  %v2065 = vadd.f32 %v2016, %v2064
  %2066 = vmatmul.f32.gmra.mxu0 %v1974
  %v2067 = vpop.f32.mrf.mxu0
  %v2068 = vadd.f32 %v2016, %v2067
  %2069 = vmatmul.f32.gmra.mxu0 %v1976
  %v2070 = vpop.f32.mrf.mxu0
  %v2071 = vadd.f32 %v2016, %v2070
  %2072 = vmatmul.f32.gmra.mxu0 %v1978
  %v2073 = vpop.f32.mrf.mxu0
  %v2074 = vadd.f32 %v2016, %v2073
  %2075 = vmatmul.f32.gmra.mxu0 %v1980
  %v2076 = vpop.f32.mrf.mxu0
  %v2077 = vadd.f32 %v2016, %v2076
  %2078 = vmatmul.f32.gmra.mxu0 %v1982
  %v2079 = vpop.f32.mrf.mxu0
  %v2080 = vadd.f32 %v2016, %v2079
  %2081 = vdwg.mxu0
  %2082 = vmatpush.msra.mxu0 %v2015
  %2083 = vmatpush.msra.mxu0 %v2014
  %2084 = vmatpush.msra.mxu0 %v2013
  %2085 = vmatpush.msra.mxu0 %v2012
  %2086 = vmatpush.msra.mxu0 %v2011
  %2087 = vmatpush.msra.mxu0 %v2010
  %2088 = vmatpush.msra.mxu0 %v2009
  %2089 = vmatpush.msra.mxu0 %v2008
  %2090 = vmatpush.msra.mxu0 %v2007
  %2091 = vmatpush.msra.mxu0 %v2006
  %2092 = vmatpush.msra.mxu0 %v2005
  %2093 = vmatpush.msra.mxu0 %v2004
  %2094 = vmatpush.msra.mxu0 %v2003
  %2095 = vmatpush.msra.mxu0 %v2002
  %2096 = vmatpush.msra.mxu0 %v2001
  %2097 = vmatpush.msra.mxu0 %v2000
  %2098 = vmatmul.f32.gmra.mxu0 %v1953
  %v2099 = vpop.f32.mrf.mxu0
  %v2100 = vadd.f32 %v2035, %v2099
  %2101 = vmatmul.f32.gmra.mxu0 %v1955
  %v2102 = vpop.f32.mrf.mxu0
  %v2103 = vadd.f32 %v2038, %v2102
  %2104 = vmatmul.f32.gmra.mxu0 %v1957
  %v2105 = vpop.f32.mrf.mxu0
  %v2106 = vadd.f32 %v2041, %v2105
  %2107 = vmatmul.f32.gmra.mxu0 %v1959
  %v2108 = vpop.f32.mrf.mxu0
  %v2109 = vadd.f32 %v2044, %v2108
  %2110 = vmatmul.f32.gmra.mxu0 %v1961
  %v2111 = vpop.f32.mrf.mxu0
  %v2112 = vadd.f32 %v2047, %v2111
  %2113 = vmatmul.f32.gmra.mxu0 %v1963
  %v2114 = vpop.f32.mrf.mxu0
  %v2115 = vadd.f32 %v2050, %v2114
  %2116 = vmatmul.f32.gmra.mxu0 %v1965
  %v2117 = vpop.f32.mrf.mxu0
  %v2118 = vadd.f32 %v2053, %v2117
  %2119 = vmatmul.f32.gmra.mxu0 %v1967
  %v2120 = vpop.f32.mrf.mxu0
  %v2121 = vadd.f32 %v2056, %v2120
  %2122 = vmatmul.f32.gmra.mxu0 %v1969
  %v2123 = vpop.f32.mrf.mxu0
  %v2124 = vadd.f32 %v2059, %v2123
  %2125 = vmatmul.f32.gmra.mxu0 %v1971
  %v2126 = vpop.f32.mrf.mxu0
  %v2127 = vadd.f32 %v2062, %v2126
  %2128 = vmatmul.f32.gmra.mxu0 %v1973
  %v2129 = vpop.f32.mrf.mxu0
  %v2130 = vadd.f32 %v2065, %v2129
  %2131 = vmatmul.f32.gmra.mxu0 %v1975
  %v2132 = vpop.f32.mrf.mxu0
  %v2133 = vadd.f32 %v2068, %v2132
  %2134 = vmatmul.f32.gmra.mxu0 %v1977
  %v2135 = vpop.f32.mrf.mxu0
  %v2136 = vadd.f32 %v2071, %v2135
  %2137 = vmatmul.f32.gmra.mxu0 %v1979
  %v2138 = vpop.f32.mrf.mxu0
  %v2139 = vadd.f32 %v2074, %v2138
  %2140 = vmatmul.f32.gmra.mxu0 %v1981
  %v2141 = vpop.f32.mrf.mxu0
  %v2142 = vadd.f32 %v2077, %v2141
  %2143 = vmatmul.f32.gmra.mxu0 %v1983
  %v2144 = vpop.f32.mrf.mxu0
  %v2145 = vadd.f32 %v2080, %v2144
  %2146 = vdwg.mxu0
  %v2147 = vadd.f32 %v946, %v2100
  %v2148 = vadd.f32 %v947, %v2103
  %v2149 = vadd.f32 %v948, %v2106
  %v2150 = vadd.f32 %v949, %v2109
  %v2151 = vadd.f32 %v950, %v2112
  %v2152 = vadd.f32 %v951, %v2115
  %v2153 = vadd.f32 %v952, %v2118
  %v2154 = vadd.f32 %v953, %v2121
  %v2155 = vadd.f32 %v954, %v2124
  %v2156 = vadd.f32 %v955, %v2127
  %v2157 = vadd.f32 %v956, %v2130
  %v2158 = vadd.f32 %v957, %v2133
  %v2159 = vadd.f32 %v958, %v2136
  %v2160 = vadd.f32 %v959, %v2139
  %v2161 = vadd.f32 %v960, %v2142
  %v2162 = vadd.f32 %v961, %v2145
  %v2163 = vmul.f32 %v2147, %v2147
  %v2164 = vmul.f32 %v2148, %v2148
  %v2165 = vmul.f32 %v2149, %v2149
  %v2166 = vmul.f32 %v2150, %v2150
  %v2167 = vmul.f32 %v2151, %v2151
  %v2168 = vmul.f32 %v2152, %v2152
  %v2169 = vmul.f32 %v2153, %v2153
  %v2170 = vmul.f32 %v2154, %v2154
  %v2171 = vmul.f32 %v2155, %v2155
  %v2172 = vmul.f32 %v2156, %v2156
  %v2173 = vmul.f32 %v2157, %v2157
  %v2174 = vmul.f32 %v2158, %v2158
  %v2175 = vmul.f32 %v2159, %v2159
  %v2176 = vmul.f32 %v2160, %v2160
  %v2177 = vmul.f32 %v2161, %v2161
  %v2178 = vmul.f32 %v2162, %v2162
  %v2179 = vsel %vm93, %v2163, 0.0
  %2180 = vadd.xlane.f32.xlu0 %v2179
  %v2181 = vpop.xlane.xlu0 %2180
  %v2182 = vsel %vm93, %v2164, 0.0
  %2183 = vadd.xlane.f32.xlu0 %v2182
  %v2184 = vpop.xlane.xlu0 %2183
  %v2185 = vsel %vm93, %v2165, 0.0
  %2186 = vadd.xlane.f32.xlu0 %v2185
  %v2187 = vpop.xlane.xlu0 %2186
  %v2188 = vsel %vm93, %v2166, 0.0
  %2189 = vadd.xlane.f32.xlu0 %v2188
  %v2190 = vpop.xlane.xlu0 %2189
  %v2191 = vsel %vm93, %v2167, 0.0
  %2192 = vadd.xlane.f32.xlu0 %v2191
  %v2193 = vpop.xlane.xlu0 %2192
  %v2194 = vsel %vm93, %v2168, 0.0
  %2195 = vadd.xlane.f32.xlu0 %v2194
  %v2196 = vpop.xlane.xlu0 %2195
  %v2197 = vsel %vm93, %v2169, 0.0
  %2198 = vadd.xlane.f32.xlu0 %v2197
  %v2199 = vpop.xlane.xlu0 %2198
  %v2200 = vsel %vm93, %v2170, 0.0
  %2201 = vadd.xlane.f32.xlu0 %v2200
  %v2202 = vpop.xlane.xlu0 %2201
  %v2203 = vsel %vm93, %v2171, 0.0
  %2204 = vadd.xlane.f32.xlu0 %v2203
  %v2205 = vpop.xlane.xlu0 %2204
  %v2206 = vsel %vm93, %v2172, 0.0
  %2207 = vadd.xlane.f32.xlu0 %v2206
  %v2208 = vpop.xlane.xlu0 %2207
  %v2209 = vsel %vm93, %v2173, 0.0
  %2210 = vadd.xlane.f32.xlu0 %v2209
  %v2211 = vpop.xlane.xlu0 %2210
  %v2212 = vsel %vm93, %v2174, 0.0
  %2213 = vadd.xlane.f32.xlu0 %v2212
  %v2214 = vpop.xlane.xlu0 %2213
  %v2215 = vsel %vm93, %v2175, 0.0
  %2216 = vadd.xlane.f32.xlu0 %v2215
  %v2217 = vpop.xlane.xlu0 %2216
  %v2218 = vsel %vm93, %v2176, 0.0
  %2219 = vadd.xlane.f32.xlu0 %v2218
  %v2220 = vpop.xlane.xlu0 %2219
  %v2221 = vsel %vm93, %v2177, 0.0
  %2222 = vadd.xlane.f32.xlu0 %v2221
  %v2223 = vpop.xlane.xlu0 %2222
  %v2224 = vsel %vm93, %v2178, 0.0
  %2225 = vadd.xlane.f32.xlu0 %v2224
  %v2226 = vpop.xlane.xlu0 %2225
  %v2227 = vmul.f32 %v2181, %v720
  %v2228 = vmul.f32 %v2184, %v720
  %v2229 = vmul.f32 %v2187, %v720
  %v2230 = vmul.f32 %v2190, %v720
  %v2231 = vmul.f32 %v2193, %v720
  %v2232 = vmul.f32 %v2196, %v720
  %v2233 = vmul.f32 %v2199, %v720
  %v2234 = vmul.f32 %v2202, %v720
  %v2235 = vmul.f32 %v2205, %v720
  %v2236 = vmul.f32 %v2208, %v720
  %v2237 = vmul.f32 %v2211, %v720
  %v2238 = vmul.f32 %v2214, %v720
  %v2239 = vmul.f32 %v2217, %v720
  %v2240 = vmul.f32 %v2220, %v720
  %v2241 = vmul.f32 %v2223, %v720
  %v2242 = vmul.f32 %v2226, %v720
  %v2243 = vadd.f32 %v2227, 1.1920929e-07
  %v2244 = vadd.f32 %v2228, 1.1920929e-07
  %v2245 = vadd.f32 %v2229, 1.1920929e-07
  %v2246 = vadd.f32 %v2230, 1.1920929e-07
  %v2247 = vadd.f32 %v2231, 1.1920929e-07
  %v2248 = vadd.f32 %v2232, 1.1920929e-07
  %v2249 = vadd.f32 %v2233, 1.1920929e-07
  %v2250 = vadd.f32 %v2234, 1.1920929e-07
  %v2251 = vadd.f32 %v2235, 1.1920929e-07
  %v2252 = vadd.f32 %v2236, 1.1920929e-07
  %v2253 = vadd.f32 %v2237, 1.1920929e-07
  %v2254 = vadd.f32 %v2238, 1.1920929e-07
  %v2255 = vadd.f32 %v2239, 1.1920929e-07
  %v2256 = vadd.f32 %v2240, 1.1920929e-07
  %v2257 = vadd.f32 %v2241, 1.1920929e-07
  %v2258 = vadd.f32 %v2242, 1.1920929e-07
  %v2259 = vrsqrt.pop %v2243
  %v2260 = vmul.f32 %v2259, %v2243
  %v2261 = vmul.f32 %v2260, %v2259
  %v2262 = vmul.f32 0.5, %v2261
  %v2263 = vsub.f32 1.5, %v2262
  %v2264 = vmul.f32 %v2259, %v2263
  %vm2265 = vweird.f32 %v2243
  %vm2266 = vweird.f32 %v2259
  %vm2267 = vmor %vm2265, %vm2266
  %v2268 = vsel %vm2267, %v2259, %v2264
  %v2269 = vrsqrt.pop %v2244
  %v2270 = vmul.f32 %v2269, %v2244
  %v2271 = vmul.f32 %v2270, %v2269
  %v2272 = vmul.f32 0.5, %v2271
  %v2273 = vsub.f32 1.5, %v2272
  %v2274 = vmul.f32 %v2269, %v2273
  %vm2275 = vweird.f32 %v2244
  %vm2276 = vweird.f32 %v2269
  %vm2277 = vmor %vm2275, %vm2276
  %v2278 = vsel %vm2277, %v2269, %v2274
  %v2279 = vrsqrt.pop %v2245
  %v2280 = vmul.f32 %v2279, %v2245
  %v2281 = vmul.f32 %v2280, %v2279
  %v2282 = vmul.f32 0.5, %v2281
  %v2283 = vsub.f32 1.5, %v2282
  %v2284 = vmul.f32 %v2279, %v2283
  %vm2285 = vweird.f32 %v2245
  %vm2286 = vweird.f32 %v2279
  %vm2287 = vmor %vm2285, %vm2286
  %v2288 = vsel %vm2287, %v2279, %v2284
  %v2289 = vrsqrt.pop %v2246
  %v2290 = vmul.f32 %v2289, %v2246
  %v2291 = vmul.f32 %v2290, %v2289
  %v2292 = vmul.f32 0.5, %v2291
  %v2293 = vsub.f32 1.5, %v2292
  %v2294 = vmul.f32 %v2289, %v2293
  %vm2295 = vweird.f32 %v2246
  %vm2296 = vweird.f32 %v2289
  %vm2297 = vmor %vm2295, %vm2296
  %v2298 = vsel %vm2297, %v2289, %v2294
  %v2299 = vrsqrt.pop %v2247
  %v2300 = vmul.f32 %v2299, %v2247
  %v2301 = vmul.f32 %v2300, %v2299
  %v2302 = vmul.f32 0.5, %v2301
  %v2303 = vsub.f32 1.5, %v2302
  %v2304 = vmul.f32 %v2299, %v2303
  %vm2305 = vweird.f32 %v2247
  %vm2306 = vweird.f32 %v2299
  %vm2307 = vmor %vm2305, %vm2306
  %v2308 = vsel %vm2307, %v2299, %v2304
  %v2309 = vrsqrt.pop %v2248
  %v2310 = vmul.f32 %v2309, %v2248
  %v2311 = vmul.f32 %v2310, %v2309
  %v2312 = vmul.f32 0.5, %v2311
  %v2313 = vsub.f32 1.5, %v2312
  %v2314 = vmul.f32 %v2309, %v2313
  %vm2315 = vweird.f32 %v2248
  %vm2316 = vweird.f32 %v2309
  %vm2317 = vmor %vm2315, %vm2316
  %v2318 = vsel %vm2317, %v2309, %v2314
  %v2319 = vrsqrt.pop %v2249
  %v2320 = vmul.f32 %v2319, %v2249
  %v2321 = vmul.f32 %v2320, %v2319
  %v2322 = vmul.f32 0.5, %v2321
  %v2323 = vsub.f32 1.5, %v2322
  %v2324 = vmul.f32 %v2319, %v2323
  %vm2325 = vweird.f32 %v2249
  %vm2326 = vweird.f32 %v2319
  %vm2327 = vmor %vm2325, %vm2326
  %v2328 = vsel %vm2327, %v2319, %v2324
  %v2329 = vrsqrt.pop %v2250
  %v2330 = vmul.f32 %v2329, %v2250
  %v2331 = vmul.f32 %v2330, %v2329
  %v2332 = vmul.f32 0.5, %v2331
  %v2333 = vsub.f32 1.5, %v2332
  %v2334 = vmul.f32 %v2329, %v2333
  %vm2335 = vweird.f32 %v2250
  %vm2336 = vweird.f32 %v2329
  %vm2337 = vmor %vm2335, %vm2336
  %v2338 = vsel %vm2337, %v2329, %v2334
  %v2339 = vrsqrt.pop %v2251
  %v2340 = vmul.f32 %v2339, %v2251
  %v2341 = vmul.f32 %v2340, %v2339
  %v2342 = vmul.f32 0.5, %v2341
  %v2343 = vsub.f32 1.5, %v2342
  %v2344 = vmul.f32 %v2339, %v2343
  %vm2345 = vweird.f32 %v2251
  %vm2346 = vweird.f32 %v2339
  %vm2347 = vmor %vm2345, %vm2346
  %v2348 = vsel %vm2347, %v2339, %v2344
  %v2349 = vrsqrt.pop %v2252
  %v2350 = vmul.f32 %v2349, %v2252
  %v2351 = vmul.f32 %v2350, %v2349
  %v2352 = vmul.f32 0.5, %v2351
  %v2353 = vsub.f32 1.5, %v2352
  %v2354 = vmul.f32 %v2349, %v2353
  %vm2355 = vweird.f32 %v2252
  %vm2356 = vweird.f32 %v2349
  %vm2357 = vmor %vm2355, %vm2356
  %v2358 = vsel %vm2357, %v2349, %v2354
  %v2359 = vrsqrt.pop %v2253
  %v2360 = vmul.f32 %v2359, %v2253
  %v2361 = vmul.f32 %v2360, %v2359
  %v2362 = vmul.f32 0.5, %v2361
  %v2363 = vsub.f32 1.5, %v2362
  %v2364 = vmul.f32 %v2359, %v2363
  %vm2365 = vweird.f32 %v2253
  %vm2366 = vweird.f32 %v2359
  %vm2367 = vmor %vm2365, %vm2366
  %v2368 = vsel %vm2367, %v2359, %v2364
  %v2369 = vrsqrt.pop %v2254
  %v2370 = vmul.f32 %v2369, %v2254
  %v2371 = vmul.f32 %v2370, %v2369
  %v2372 = vmul.f32 0.5, %v2371
  %v2373 = vsub.f32 1.5, %v2372
  %v2374 = vmul.f32 %v2369, %v2373
  %vm2375 = vweird.f32 %v2254
  %vm2376 = vweird.f32 %v2369
  %vm2377 = vmor %vm2375, %vm2376
  %v2378 = vsel %vm2377, %v2369, %v2374
  %v2379 = vrsqrt.pop %v2255
  %v2380 = vmul.f32 %v2379, %v2255
  %v2381 = vmul.f32 %v2380, %v2379
  %v2382 = vmul.f32 0.5, %v2381
  %v2383 = vsub.f32 1.5, %v2382
  %v2384 = vmul.f32 %v2379, %v2383
  %vm2385 = vweird.f32 %v2255
  %vm2386 = vweird.f32 %v2379
  %vm2387 = vmor %vm2385, %vm2386
  %v2388 = vsel %vm2387, %v2379, %v2384
  %v2389 = vrsqrt.pop %v2256
  %v2390 = vmul.f32 %v2389, %v2256
  %v2391 = vmul.f32 %v2390, %v2389
  %v2392 = vmul.f32 0.5, %v2391
  %v2393 = vsub.f32 1.5, %v2392
  %v2394 = vmul.f32 %v2389, %v2393
  %vm2395 = vweird.f32 %v2256
  %vm2396 = vweird.f32 %v2389
  %vm2397 = vmor %vm2395, %vm2396
  %v2398 = vsel %vm2397, %v2389, %v2394
  %v2399 = vrsqrt.pop %v2257
  %v2400 = vmul.f32 %v2399, %v2257
  %v2401 = vmul.f32 %v2400, %v2399
  %v2402 = vmul.f32 0.5, %v2401
  %v2403 = vsub.f32 1.5, %v2402
  %v2404 = vmul.f32 %v2399, %v2403
  %vm2405 = vweird.f32 %v2257
  %vm2406 = vweird.f32 %v2399
  %vm2407 = vmor %vm2405, %vm2406
  %v2408 = vsel %vm2407, %v2399, %v2404
  %v2409 = vrsqrt.pop %v2258
  %v2410 = vmul.f32 %v2409, %v2258
  %v2411 = vmul.f32 %v2410, %v2409
  %v2412 = vmul.f32 0.5, %v2411
  %v2413 = vsub.f32 1.5, %v2412
  %v2414 = vmul.f32 %v2409, %v2413
  %vm2415 = vweird.f32 %v2258
  %vm2416 = vweird.f32 %v2409
  %vm2417 = vmor %vm2415, %vm2416
  %v2418 = vsel %vm2417, %v2409, %v2414
  %v2419 = vmul.f32 %v2147, %v2268
  %v2420 = vmul.f32 %v2148, %v2278
  %v2421 = vmul.f32 %v2149, %v2288
  %v2422 = vmul.f32 %v2150, %v2298
  %v2423 = vmul.f32 %v2151, %v2308
  %v2424 = vmul.f32 %v2152, %v2318
  %v2425 = vmul.f32 %v2153, %v2328
  %v2426 = vmul.f32 %v2154, %v2338
  %v2427 = vmul.f32 %v2155, %v2348
  %v2428 = vmul.f32 %v2156, %v2358
  %v2429 = vmul.f32 %v2157, %v2368
  %v2430 = vmul.f32 %v2158, %v2378
  %v2431 = vmul.f32 %v2159, %v2388
  %v2432 = vmul.f32 %v2160, %v2398
  %v2433 = vmul.f32 %v2161, %v2408
  %v2434 = vmul.f32 %v2162, %v2418
  %v2435 = vperm.slane %v527, 0
  %v2436 = vmul.f32 %v2419, %v2435
  %v2437 = vmul.f32 %v2420, %v2435
  %v2438 = vmul.f32 %v2421, %v2435
  %v2439 = vmul.f32 %v2422, %v2435
  %v2440 = vmul.f32 %v2423, %v2435
  %v2441 = vmul.f32 %v2424, %v2435
  %v2442 = vmul.f32 %v2425, %v2435
  %v2443 = vmul.f32 %v2426, %v2435
  %v2444 = vmul.f32 %v2427, %v2435
  %v2445 = vmul.f32 %v2428, %v2435
  %v2446 = vmul.f32 %v2429, %v2435
  %v2447 = vmul.f32 %v2430, %v2435
  %v2448 = vmul.f32 %v2431, %v2435
  %v2449 = vmul.f32 %v2432, %v2435
  %v2450 = vmul.f32 %v2433, %v2435
  %v2451 = vmul.f32 %v2434, %v2435
  %2452 = vst.msk [vmem:[%s9] sm:$0xff] %vm93, %v2436
  %2453 = vst.msk [vmem:[%s9 + $0x8] sm:$0xff] %vm93, %v2437
  %2454 = vst.msk [vmem:[%s9 + $0x10] sm:$0xff] %vm93, %v2438
  %2455 = vst.msk [vmem:[%s9 + $0x18] sm:$0xff] %vm93, %v2439
  %2456 = vst.msk [vmem:[%s9 + $0x20] sm:$0xff] %vm93, %v2440
  %2457 = vst.msk [vmem:[%s9 + $0x28] sm:$0xff] %vm93, %v2441
  %2458 = vst.msk [vmem:[%s9 + $0x30] sm:$0xff] %vm93, %v2442
  %2459 = vst.msk [vmem:[%s9 + $0x38] sm:$0xff] %vm93, %v2443
  %2460 = vst.msk [vmem:[%s9 + $0x40] sm:$0xff] %vm93, %v2444
  %2461 = vst.msk [vmem:[%s9 + $0x48] sm:$0xff] %vm93, %v2445
  %2462 = vst.msk [vmem:[%s9 + $0x50] sm:$0xff] %vm93, %v2446
  %2463 = vst.msk [vmem:[%s9 + $0x58] sm:$0xff] %vm93, %v2447
  %2464 = vst.msk [vmem:[%s9 + $0x60] sm:$0xff] %vm93, %v2448
  %2465 = vst.msk [vmem:[%s9 + $0x68] sm:$0xff] %vm93, %v2449
  %2466 = vst.msk [vmem:[%s9 + $0x70] sm:$0xff] %vm93, %v2450
  %2467 = vst.msk [vmem:[%s9 + $0x78] sm:$0xff] %vm93, %v2451
  // Predicated region
  $region38: #{tpu_custom_call.1} parent=0 // pred_check
    _
  $region39: #{tpu_custom_call.1} parent=0 // pred_check_branch
    %2469 = sbr.rel (0) target = $region41
  $region40: #{tpu_custom_call.1} parent=0 // pred_region
    _
  $region41: #{tpu_custom_call.1} parent=0 // pred_fallthru
    _
  // Predicated region
  $region42: #{tpu_custom_call.1} parent=0 // pred_check
    _
  $region43: #{tpu_custom_call.1} parent=0 // pred_check_branch
    %2471 = sbr.rel (0) target = $region45
  $region44: #{tpu_custom_call.1} parent=0 // pred_region
    _
  $region45: #{tpu_custom_call.1} parent=0 // pred_fallthru
    _

</llo_original>
